<compile_context>
chip_gen: v7x
topology: tpu7x:2x2x1
jax: 0.10.0
libtpu: 0.0.40
codegen_flags: <defaults>
</compile_context>

<pallas_src>
import math

import jax
import jax.numpy as jnp
import numpy as np
from jax.experimental import pallas as pl
from jax.experimental.pallas import tpu as pltpu


# ----------------------------------------------------------------------------
# Fused sampling kernel: one grid step == one DDIM step.
# ----------------------------------------------------------------------------
def _fused_sampler_kernel(sched_ref,                                   # SMEM (N, 4)
                          noise_ref, temb_ref, condc_ref, condu_ref,   # VMEM (loop-invariant)
                          scale_ref, winT_ref, woutT_ref, boutT_ref,
                          out_ref,                                     # VMEM output (per step)
                          x_scr):                                      # VMEM scratch (resident x)
    s = pl.program_id(0)

    @pl.when(s == 0)
    def _init():
        x_scr[...] = noise_ref[...]          # x_T <- noise

    # Per-step DDIM (eta=0) schedule scalars from SMEM.
    sr = sched_ref[s, 0]        # 1/sqrt(abar_t)
    srm1 = sched_ref[s, 1]      # sqrt(1/abar_t - 1)
    sap = sched_ref[s, 2]       # sqrt(abar_{t-1})
    s1m = sched_ref[s, 3]       # sqrt(1 - abar_{t-1})
    inv_srm1 = 1.0 / srm1

    x = x_scr[...]              # (3, half*HW) -- resident across grid steps
    winT = winT_ref[...]        # (D, 3)
    nhw = x.shape[1]

    # W_in (K=3) on the VPU: three broadcast multiply-adds instead of a
    # <3%-utilized MXU matmul (frees the extended slot for the W_out matmul).
    lin = (winT[:, 0:1] * x[0:1, :]
           + winT[:, 1:2] * x[1:2, :]
           + winT[:, 2:3] * x[2:3, :])               # (D, half*HW)

    # Time embedding (b_in already folded in): a single (D,1) broadcast per step,
    # reused by both branches.
    base = lin + temb_ref[s]                          # (D, half*HW)

    # cond / uncond activations stacked along the lane axis -> one W_out matmul.
    h = jnp.concatenate([base + condc_ref[...],
                         base + condu_ref[...]], axis=1)   # (D, 2*half*HW)
    h = h * jax.nn.sigmoid(h)                               # SiLU (EUP)

    eps_all = jnp.dot(woutT_ref[...], h,
                      preferred_element_type=jnp.float32) + boutT_ref[...]  # (3, 2*half*HW)
    eps_c = eps_all[:, :nhw]
    eps_u = eps_all[:, nhw:]

    # classifier-free guidance fusion (per-column scale map precomputed in wrapper)
    eps = eps_u + scale_ref[...] * (eps_c - eps_u)          # (3, half*HW)

    # DDIM (eta=0) update with clip_denoised=True
    x0 = jnp.clip(sr * x - srm1 * eps, -1.0, 1.0)
    eps2 = (sr * x - x0) * inv_srm1
    xn = sap * x0 + s1m * eps2

    x_scr[...] = xn
    out_ref[0] = xn             # one contiguous, lane-dense store per step


@jax.jit
def _sample_loop(sched, noise_flat, temb3, condC, condU, scale_map,
                 winT, woutT, boutT):
    """Single pallas_call running all DDIM steps; returns (N, 3, half*HW)."""
    num_steps = sched.shape[0]
    cin, nhw = noise_flat.shape

    def whole(arr):
        shape = tuple(arr.shape)
        zeros = (0,) * len(shape)
        return pl.BlockSpec(shape, lambda s, z=zeros: z)

    smem_spec = pl.BlockSpec(memory_space=pltpu.MemorySpace.SMEM)

    # NOTE: loop-invariant inputs use default double-buffered BlockSpecs with a
    # constant index_map; the runtime does not re-fetch a block whose index
    # does not change, and total resident footprint here is <1 MiB, so no
    # explicit pl.Buffered(1) is needed at these sizes.
    grid_spec = pltpu.PrefetchScalarGridSpec(
        num_scalar_prefetch=0,
        grid=(num_steps,),
        in_specs=[
            smem_spec,            # sched      (N, 4)
            whole(noise_flat),    # (3, half*HW)
            whole(temb3),         # (N, D, 1)   -- b_in folded in
            whole(condC),         # (D, half*HW)
            whole(condU),         # (D, half*HW)
            whole(scale_map),     # (1, half*HW)
            whole(winT),          # (D, 3)
            whole(woutT),         # (3, D)
            whole(boutT),         # (3, 1)
        ],
        out_specs=pl.BlockSpec((1, cin, nhw), lambda s: (s, 0, 0)),
        scratch_shapes=[
            pltpu.VMEM((cin, nhw), jnp.float32),   # resident x
        ],
    )

    return pl.pallas_call(
        _fused_sampler_kernel,
        out_shape=jax.ShapeDtypeStruct((num_steps, cin, nhw), jnp.float32),
        grid_spec=grid_spec,
        compiler_params=pltpu.CompilerParams(
            dimension_semantics=("arbitrary",),    # x carried across steps
        ),
    )(sched, noise_flat, temb3, condC, condU, scale_map, winT, woutT, boutT)


# ----------------------------------------------------------------------------
# Glue: noise schedule, respacing, time embedding (plain JAX / numpy)
# ----------------------------------------------------------------------------
def _cosine_alphas_cumprod(T):
    def abar(x):
        return math.cos((x + 0.008) / 1.008 * math.pi / 2) ** 2
    betas = [min(1.0 - abar((i + 1) / T) / abar(i / T), 0.999) for i in range(T)]
    return np.cumprod(1.0 - np.array(betas, dtype=np.float64))


def _space_timesteps(num_timesteps, respacing):
    if respacing.startswith("ddim"):
        desired = int(respacing[len("ddim"):])
        for stride in range(1, num_timesteps):
            if len(range(0, num_timesteps, stride)) == desired:
                return list(range(0, num_timesteps, stride))
        raise ValueError(f"cannot create {desired} ddim steps")
    raise NotImplementedError("only 'ddimN' respacing is implemented")


def _timestep_embedding(t, dim, max_period=10000.0):
    half = dim // 2
    freqs = jnp.exp(-math.log(max_period) * jnp.arange(half, dtype=jnp.float32) / half)
    args = t.astype(jnp.float32)[:, None] * freqs[None, :]
    return jnp.concatenate([jnp.cos(args), jnp.sin(args)], axis=-1)


# ----------------------------------------------------------------------------
# The module
# ----------------------------------------------------------------------------
class Text2ImProgressivePallasModel:
    """JAX/Pallas port of Text2ImProgressiveModel.forward (CF-guided DDIM loop)."""

    def __init__(self, *, image_size=16, clip_dim=32, xf_width=32, text_ctx=8,
                 model_channels=32, diffusion_steps=64, learn_sigma=True):
        assert learn_sigma  # out_channels = 6
        self.image_size = image_size
        self.clip_dim = clip_dim
        self.xf_width = xf_width
        self.text_ctx = text_ctx
        self.model_channels = model_channels
        self.diffusion_steps = diffusion_steps

        k = jax.random.PRNGKey(0)
        ks = jax.random.split(k, 7)
        sc = lambda d: 1.0 / math.sqrt(d)
        D = model_channels
        self.params = dict(
            W_y=jax.random.normal(ks[0], (clip_dim, D), jnp.float32) * sc(clip_dim),
            W_f=jax.random.normal(ks[1], (clip_dim, D), jnp.float32) * sc(clip_dim),
            W_s=jax.random.normal(ks[2], (xf_width, D), jnp.float32) * sc(xf_width),
            W_in=jax.random.normal(ks[3], (3, D), jnp.float32) * sc(3),
            b_in=jnp.zeros((1, D), jnp.float32),
            W_out=jax.random.normal(ks[4], (D, 6), jnp.float32) * sc(D),
            b_out=jnp.zeros((1, 6), jnp.float32),
        )
        # "null image feature" parameter used for the CF (uncond) half
        self.cf_param = jax.random.normal(ks[5], (clip_dim,), jnp.float32) * 0.02
        self.alphas_cumprod = _cosine_alphas_cumprod(diffusion_steps)

    # --- forward: progressive sampling generator -----------------------------
    def forward(self, txt_feat, txt_feat_seq, tok, mask, img_feat=None,
                cf_guidance_scales=None, timestep_respacing=None):
        # NOTE: the reference asserts all(cf_guidance_scales > 0.0); checking the
        # device values here would force a host sync before every call, so only
        # the presence check is kept.
        assert cf_guidance_scales is not None
        assert img_feat is not None
        del tok  # not used in the forward pass (matches reference cond dict)

        scales = jnp.asarray(cf_guidance_scales, jnp.float32).reshape(-1)
        bsz = txt_feat.shape[0]
        half = bsz // 2
        img_sz = self.image_size
        hw = img_sz * img_sz
        D = self.model_channels

        use_ddim = timestep_respacing.startswith(("ddim", "fast"))
        assert use_ddim, "only ddim respacing implemented"
        ts_kept = _space_timesteps(self.diffusion_steps, timestep_respacing)
        num_steps = len(ts_kept)
        abar = self.alphas_cumprod[np.array(ts_kept)]

        # Per-grid-step schedule (grid step s walks timesteps in reverse order).
        sched_np = np.zeros((num_steps, 4), np.float32)
        ts_rev = np.zeros((num_steps,), np.float32)
        for s in range(num_steps):
            i = num_steps - 1 - s
            a_t = float(abar[i])
            a_prev = float(abar[i - 1]) if i > 0 else 1.0
            sched_np[s] = [1.0 / math.sqrt(a_t),
                           math.sqrt(1.0 / a_t - 1.0),
                           math.sqrt(a_prev),
                           math.sqrt(max(1.0 - a_prev, 0.0))]
            ts_rev[s] = ts_kept[i]
        sched = jnp.asarray(sched_np)

        p = self.params

        # --- one-time (loop-invariant) layout / conditioning prep ------------
        # Time embedding with b_in folded in: (N, D, 1)
        temb_all = _timestep_embedding(jnp.asarray(ts_rev), D) + p["b_in"]     # (N, D)
        temb3 = temb_all[:, :, None]

        # Conditioning: masked text pooling + folded [W_y; W_f; W_s] matmul.
        cf_feat = jnp.broadcast_to(self.cf_param[None, :], (half, self.clip_dim))
        feat = jnp.concatenate([img_feat, cf_feat], axis=0)                    # (bsz, clip)
        maskf = mask.astype(jnp.float32)                                       # (bsz, L)
        denom = jnp.maximum(jnp.sum(maskf, axis=1, keepdims=True), 1.0)        # (bsz, 1)
        pooled = jnp.sum(txt_feat_seq * maskf[:, :, None], axis=1) / denom     # (bsz, Dx)
        cat = jnp.concatenate([feat, txt_feat, pooled], axis=1)                # (bsz, 96)
        Wc = jnp.concatenate([p["W_y"], p["W_f"], p["W_s"]], axis=0)           # (96, D)
        condT = (cat @ Wc).T                                                   # (D, bsz)

        # Per-column broadcast maps over the merged (half*HW) lane axis.
        condC = jnp.repeat(condT[:, :half], hw, axis=1)                        # (D, half*HW)
        condU = jnp.repeat(condT[:, half:], hw, axis=1)                        # (D, half*HW)
        scale_map = jnp.repeat(scales[:half], hw)[None, :]                     # (1, half*HW)

        winT = p["W_in"].T                                                     # (D, 3)
        woutT = p["W_out"][:, :3].T                                            # (3, D)
        boutT = p["b_out"][:, :3].T                                            # (3, 1)

        key = jax.random.PRNGKey(1234)
        noise = jax.random.normal(key, (bsz, 3, img_sz, img_sz), jnp.float32)
        # Only x[:half] is observable (combined=[half,half]; yield sample[:half]).
        # Channel-major merged layout: (3, half*HW), block b at lanes [b*HW, (b+1)*HW).
        noise_flat = jnp.transpose(noise[:half].reshape(half, 3, hw),
                                   (1, 0, 2)).reshape(3, half * hw)

        samples = _sample_loop(sched, noise_flat, temb3, condC, condU,
                               scale_map, winT, woutT, boutT)                  # (N, 3, half*HW)
        samples = jnp.transpose(samples.reshape(num_steps, 3, half, hw),
                                (0, 2, 1, 3)).reshape(num_steps, half, 3,
                                                      img_sz, img_sz)

        for s in range(num_steps):
            yield samples[s]     # sample[: sample.shape[0] // 2]


if __name__ == "__main__":
    bsz, clip_dim, text_ctx, xf_width, img_sz = 4, 32, 8, 32, 16

    model = Text2ImProgressivePallasModel(
        image_size=img_sz, clip_dim=clip_dim, xf_width=xf_width,
        text_ctx=text_ctx, model_channels=32, diffusion_steps=64)

    key = jax.random.PRNGKey(0)
    ks = jax.random.split(key, 5)
    txt_feat = jax.random.normal(ks[0], (bsz, clip_dim), jnp.float32)
    txt_feat_seq = jax.random.normal(ks[1], (bsz, text_ctx, xf_width), jnp.float32)
    tok = jax.random.randint(ks[2], (bsz, text_ctx), 0, 100)
    mask = jnp.ones((bsz, text_ctx), dtype=bool)
    img_feat = jax.random.normal(ks[3], (bsz // 2, clip_dim), jnp.float32)
    cf_scales = jnp.array([3.0, 5.0], jnp.float32)

    last = None
    n_yield = 0
    for sample in model.forward(txt_feat, txt_feat_seq, tok, mask,
                                img_feat=img_feat,
                                cf_guidance_scales=cf_scales,
                                timestep_respacing="ddim8"):
        last = sample
        n_yield += 1

    last = jax.block_until_ready(last)
    assert n_yield == 8, n_yield
    assert last.shape == (bsz // 2, 3, img_sz, img_sz), last.shape
    assert bool(jnp.all(jnp.isfinite(last)))
    print("KERNEL_OK")
</pallas_src>

<mosaic_0001>
module attributes {stable_mosaic.version = 11 : i64} {
  func.func @_fused_sampler_kernel(%arg0: i32, %arg1: memref<8x4xf32, #tpu.memory_space<smem>>, %arg2: memref<3x512xf32, #tpu.memory_space<vmem>>, %arg3: memref<8x32x1xf32, #tpu.memory_space<vmem>>, %arg4: memref<32x512xf32, #tpu.memory_space<vmem>>, %arg5: memref<32x512xf32, #tpu.memory_space<vmem>>, %arg6: memref<1x512xf32, #tpu.memory_space<vmem>>, %arg7: memref<32x3xf32, #tpu.memory_space<vmem>>, %arg8: memref<3x32xf32, #tpu.memory_space<vmem>>, %arg9: memref<3x1xf32, #tpu.memory_space<vmem>>, %arg10: memref<1x3x512xf32, #tpu.memory_space<vmem>>, %arg11: memref<3x512xf32, #tpu.memory_space<vmem>>) attributes {dimension_semantics = [#tpu.dimension_semantics<arbitrary>], iteration_bounds = array<i64: 8>, scalar_prefetch = 0 : i64, scratch_operands = 1 : i64, tpu.core_type = #tpu.core_type<tc>, window_params = [{transform_indices = @transform_0, window_bounds = array<i64: 8, 4>}, {pipeline_mode = #tpu.pipeline_mode<synchronous>, transform_indices = @transform_1, window_bounds = array<i64: 3, 512>}, {pipeline_mode = #tpu.pipeline_mode<synchronous>, transform_indices = @transform_2, window_bounds = array<i64: 8, 32, 1>}, {pipeline_mode = #tpu.pipeline_mode<synchronous>, transform_indices = @transform_3, window_bounds = array<i64: 32, 512>}, {pipeline_mode = #tpu.pipeline_mode<synchronous>, transform_indices = @transform_4, window_bounds = array<i64: 32, 512>}, {pipeline_mode = #tpu.pipeline_mode<synchronous>, transform_indices = @transform_5, window_bounds = array<i64: 1, 512>}, {pipeline_mode = #tpu.pipeline_mode<synchronous>, transform_indices = @transform_6, window_bounds = array<i64: 32, 3>}, {pipeline_mode = #tpu.pipeline_mode<synchronous>, transform_indices = @transform_7, window_bounds = array<i64: 3, 32>}, {pipeline_mode = #tpu.pipeline_mode<synchronous>, transform_indices = @transform_8, window_bounds = array<i64: 3, 1>}, {transform_indices = @transform_9, window_bounds = array<i64: 1, 3, 512>}]} {
    %c0_i32 = arith.constant 0 : i32
    %0 = arith.cmpi eq, %arg0, %c0_i32 : i32
    %1 = arith.extui %0 : i1 to i32
    %c0_i32_0 = arith.constant 0 : i32
    %2 = arith.cmpi ne, %1, %c0_i32_0 : i32
    scf.if %2 {
      %c0_26 = arith.constant 0 : index
      %c0_27 = arith.constant 0 : index
      %82 = vector.load %arg2[%c0_26, %c0_27] : memref<3x512xf32, #tpu.memory_space<vmem>>, vector<3x512xf32>
      %c0_28 = arith.constant 0 : index
      %c0_29 = arith.constant 0 : index
      %83 = vector.load %arg11[%c0_28, %c0_29] : memref<3x512xf32, #tpu.memory_space<vmem>>, vector<3x512xf32>
      tpu.vector_store %arg11[%c0_28, %c0_29], %82 {strides = array<i32>} : memref<3x512xf32, #tpu.memory_space<vmem>>, vector<3x512xf32>,
    } else {
    }
    %3 = arith.index_cast %arg0 : i32 to index
    %c0 = arith.constant 0 : index
    %4 = memref.load %arg1[%3, %c0] : memref<8x4xf32, #tpu.memory_space<smem>>
    %5 = arith.index_cast %arg0 : i32 to index
    %c1 = arith.constant 1 : index
    %6 = memref.load %arg1[%5, %c1] : memref<8x4xf32, #tpu.memory_space<smem>>
    %7 = arith.index_cast %arg0 : i32 to index
    %c2 = arith.constant 2 : index
    %8 = memref.load %arg1[%7, %c2] : memref<8x4xf32, #tpu.memory_space<smem>>
    %9 = arith.index_cast %arg0 : i32 to index
    %c3 = arith.constant 3 : index
    %10 = memref.load %arg1[%9, %c3] : memref<8x4xf32, #tpu.memory_space<smem>>
    %cst = arith.constant 1.000000e+00 : f32
    %11 = arith.divf %cst, %6 : f32
    %c0_1 = arith.constant 0 : index
    %c0_2 = arith.constant 0 : index
    %12 = vector.load %arg11[%c0_1, %c0_2] : memref<3x512xf32, #tpu.memory_space<vmem>>, vector<3x512xf32>
    %c0_3 = arith.constant 0 : index
    %c0_4 = arith.constant 0 : index
    %13 = vector.load %arg7[%c0_3, %c0_4] : memref<32x3xf32, #tpu.memory_space<vmem>>, vector<32x3xf32>
    %14 = vector.extract_strided_slice %13 {offsets = [0, 0], sizes = [32, 1], strides = [1, 1]} : vector<32x3xf32> to vector<32x1xf32>
    %15 = vector.extract_strided_slice %12 {offsets = [0, 0], sizes = [1, 512], strides = [1, 1]} : vector<3x512xf32> to vector<1x512xf32>
    %16 = vector.broadcast %14 : vector<32x1xf32> to vector<32x512xf32>
    %17 = vector.broadcast %15 : vector<1x512xf32> to vector<32x512xf32>
    %18 = arith.mulf %16, %17 : vector<32x512xf32>
    %19 = vector.extract_strided_slice %13 {offsets = [0, 1], sizes = [32, 1], strides = [1, 1]} : vector<32x3xf32> to vector<32x1xf32>
    %20 = vector.extract_strided_slice %12 {offsets = [1, 0], sizes = [1, 512], strides = [1, 1]} : vector<3x512xf32> to vector<1x512xf32>
    %21 = vector.broadcast %19 : vector<32x1xf32> to vector<32x512xf32>
    %22 = vector.broadcast %20 : vector<1x512xf32> to vector<32x512xf32>
    %23 = arith.mulf %21, %22 : vector<32x512xf32>
    %24 = arith.addf %18, %23 : vector<32x512xf32>
    %25 = vector.extract_strided_slice %13 {offsets = [0, 2], sizes = [32, 1], strides = [1, 1]} : vector<32x3xf32> to vector<32x1xf32>
    %26 = vector.extract_strided_slice %12 {offsets = [2, 0], sizes = [1, 512], strides = [1, 1]} : vector<3x512xf32> to vector<1x512xf32>
    %27 = vector.broadcast %25 : vector<32x1xf32> to vector<32x512xf32>
    %28 = vector.broadcast %26 : vector<1x512xf32> to vector<32x512xf32>
    %29 = arith.mulf %27, %28 : vector<32x512xf32>
    %30 = arith.addf %24, %29 : vector<32x512xf32>
    %31 = arith.index_cast %arg0 : i32 to index
    %c0_5 = arith.constant 0 : index
    %c0_6 = arith.constant 0 : index
    %32 = vector.load %arg3[%31, %c0_5, %c0_6] : memref<8x32x1xf32, #tpu.memory_space<vmem>>, vector<1x32x1xf32>
    %33 = vector.shape_cast %32 : vector<1x32x1xf32> to vector<32x1xf32>
    %34 = vector.broadcast %33 : vector<32x1xf32> to vector<32x512xf32>
    %35 = arith.addf %30, %34 : vector<32x512xf32>
    %c0_7 = arith.constant 0 : index
    %c0_8 = arith.constant 0 : index
    %36 = vector.load %arg4[%c0_7, %c0_8] : memref<32x512xf32, #tpu.memory_space<vmem>>, vector<32x512xf32>
    %37 = arith.addf %35, %36 : vector<32x512xf32>
    %c0_9 = arith.constant 0 : index
    %c0_10 = arith.constant 0 : index
    %38 = vector.load %arg5[%c0_9, %c0_10] : memref<32x512xf32, #tpu.memory_space<vmem>>, vector<32x512xf32>
    %39 = arith.addf %35, %38 : vector<32x512xf32>
    %40 = tpu.concatenate %37, %39 in 1 : vector<32x512xf32>, vector<32x512xf32> -> vector<32x1024xf32>
    %41 = arith.negf %40 : vector<32x1024xf32>
    %42 = math.exp %41 : vector<32x1024xf32>
    %cst_11 = arith.constant 1.000000e+00 : f32
    %43 = vector.broadcast %cst_11 : f32 to vector<32x1024xf32>
    %44 = arith.addf %43, %42 : vector<32x1024xf32>
    %45 = arith.divf %43, %44 : vector<32x1024xf32>
    %46 = arith.mulf %40, %45 : vector<32x1024xf32>
    %c0_12 = arith.constant 0 : index
    %c0_13 = arith.constant 0 : index
    %47 = vector.load %arg8[%c0_12, %c0_13] : memref<3x32xf32, #tpu.memory_space<vmem>>, vector<3x32xf32>
    %cst_14 = arith.constant dense<0.000000e+00> : vector<3x1024xf32>
    %48 = tpu.matmul %47, %46, %cst_14 {dimension_numbers = #tpu.dot_dimension_numbers<[1], [0], [0], [1], [0, 0, 1, 1], [], []>} : vector<3x32xf32>, vector<32x1024xf32>, vector<3x1024xf32> -> vector<3x1024xf32>
    %c0_15 = arith.constant 0 : index
    %c0_16 = arith.constant 0 : index
    %49 = vector.load %arg9[%c0_15, %c0_16] : memref<3x1xf32, #tpu.memory_space<vmem>>, vector<3x1xf32>
    %50 = vector.broadcast %49 : vector<3x1xf32> to vector<3x1024xf32>
    %51 = arith.addf %48, %50 : vector<3x1024xf32>
    %52 = vector.extract_strided_slice %51 {offsets = [0, 0], sizes = [3, 512], strides = [1, 1]} : vector<3x1024xf32> to vector<3x512xf32>
    %53 = vector.extract_strided_slice %51 {offsets = [0, 512], sizes = [3, 512], strides = [1, 1]} : vector<3x1024xf32> to vector<3x512xf32>
    %c0_17 = arith.constant 0 : index
    %c0_18 = arith.constant 0 : index
    %54 = vector.load %arg6[%c0_17, %c0_18] : memref<1x512xf32, #tpu.memory_space<vmem>>, vector<1x512xf32>
    %55 = arith.subf %52, %53 : vector<3x512xf32>
    %56 = vector.broadcast %54 : vector<1x512xf32> to vector<3x512xf32>
    %57 = arith.mulf %56, %55 : vector<3x512xf32>
    %58 = arith.addf %53, %57 : vector<3x512xf32>
    %59 = vector.broadcast %4 : f32 to vector<3x512xf32>
    %60 = arith.mulf %59, %12 : vector<3x512xf32>
    %61 = vector.broadcast %6 : f32 to vector<3x512xf32>
    %62 = arith.mulf %61, %58 : vector<3x512xf32>
    %63 = arith.subf %60, %62 : vector<3x512xf32>
    %cst_19 = arith.constant -1.000000e+00 : f32
    %cst_20 = arith.constant 1.000000e+00 : f32
    %64 = vector.broadcast %cst_19 : f32 to vector<3x512xf32>
    %65 = arith.maximumf %64, %63 : vector<3x512xf32>
    %66 = vector.broadcast %cst_20 : f32 to vector<3x512xf32>
    %67 = arith.minimumf %66, %65 : vector<3x512xf32>
    %68 = vector.broadcast %4 : f32 to vector<3x512xf32>
    %69 = arith.mulf %68, %12 : vector<3x512xf32>
    %70 = arith.subf %69, %67 : vector<3x512xf32>
    %71 = vector.broadcast %11 : f32 to vector<3x512xf32>
    %72 = arith.mulf %70, %71 : vector<3x512xf32>
    %73 = vector.broadcast %8 : f32 to vector<3x512xf32>
    %74 = arith.mulf %73, %67 : vector<3x512xf32>
    %75 = vector.broadcast %10 : f32 to vector<3x512xf32>
    %76 = arith.mulf %75, %72 : vector<3x512xf32>
    %77 = arith.addf %74, %76 : vector<3x512xf32>
    %c0_21 = arith.constant 0 : index
    %c0_22 = arith.constant 0 : index
    %78 = vector.load %arg11[%c0_21, %c0_22] : memref<3x512xf32, #tpu.memory_space<vmem>>, vector<3x512xf32>
    tpu.vector_store %arg11[%c0_21, %c0_22], %77 {strides = array<i32>} : memref<3x512xf32, #tpu.memory_space<vmem>>, vector<3x512xf32>,
    %c0_23 = arith.constant 0 : index
    %c0_24 = arith.constant 0 : index
    %c0_25 = arith.constant 0 : index
    %79 = vector.load %arg10[%c0_23, %c0_24, %c0_25] : memref<1x3x512xf32, #tpu.memory_space<vmem>>, vector<1x3x512xf32>
    %80 = vector.shape_cast %79 : vector<1x3x512xf32> to vector<3x512xf32>
    %81 = vector.shape_cast %77 : vector<3x512xf32> to vector<1x3x512xf32>
    tpu.vector_store %arg10[%c0_23, %c0_24, %c0_25], %81 {strides = array<i32>} : memref<1x3x512xf32, #tpu.memory_space<vmem>>, vector<1x3x512xf32>,
    return
  }
  func.func @transform_0(%arg0: i32) -> (i32, i32) {
    %c0_i32 = arith.constant 0 : i32
    %c0_i32_0 = arith.constant 0 : i32
    %c0_i32_1 = arith.constant 0 : i32
    return %c0_i32, %c0_i32_0 : i32, i32
  }
  func.func @transform_1(%arg0: i32) -> (i32, i32) {
    %c0_i32 = arith.constant 0 : i32
    %c0_i32_0 = arith.constant 0 : i32
    %c0_i32_1 = arith.constant 0 : i32
    return %c0_i32, %c0_i32_0 : i32, i32
  }
  func.func @transform_2(%arg0: i32) -> (i32, i32, i32) {
    %c0_i32 = arith.constant 0 : i32
    %c0_i32_0 = arith.constant 0 : i32
    %c0_i32_1 = arith.constant 0 : i32
    %c0_i32_2 = arith.constant 0 : i32
    return %c0_i32, %c0_i32_0, %c0_i32_1 : i32, i32, i32
  }
  func.func @transform_3(%arg0: i32) -> (i32, i32) {
    %c0_i32 = arith.constant 0 : i32
    %c0_i32_0 = arith.constant 0 : i32
    %c0_i32_1 = arith.constant 0 : i32
    return %c0_i32, %c0_i32_0 : i32, i32
  }
  func.func @transform_4(%arg0: i32) -> (i32, i32) {
    %c0_i32 = arith.constant 0 : i32
    %c0_i32_0 = arith.constant 0 : i32
    %c0_i32_1 = arith.constant 0 : i32
    return %c0_i32, %c0_i32_0 : i32, i32
  }
  func.func @transform_5(%arg0: i32) -> (i32, i32) {
    %c0_i32 = arith.constant 0 : i32
    %c0_i32_0 = arith.constant 0 : i32
    %c0_i32_1 = arith.constant 0 : i32
    return %c0_i32, %c0_i32_0 : i32, i32
  }
  func.func @transform_6(%arg0: i32) -> (i32, i32) {
    %c0_i32 = arith.constant 0 : i32
    %c0_i32_0 = arith.constant 0 : i32
    %c0_i32_1 = arith.constant 0 : i32
    return %c0_i32, %c0_i32_0 : i32, i32
  }
  func.func @transform_7(%arg0: i32) -> (i32, i32) {
    %c0_i32 = arith.constant 0 : i32
    %c0_i32_0 = arith.constant 0 : i32
    %c0_i32_1 = arith.constant 0 : i32
    return %c0_i32, %c0_i32_0 : i32, i32
  }
  func.func @transform_8(%arg0: i32) -> (i32, i32) {
    %c0_i32 = arith.constant 0 : i32
    %c0_i32_0 = arith.constant 0 : i32
    %c0_i32_1 = arith.constant 0 : i32
    return %c0_i32, %c0_i32_0 : i32, i32
  }
  func.func @transform_9(%arg0: i32) -> (i32, i32, i32) {
    %c0_i32 = arith.constant 0 : i32
    %c0_i32_0 = arith.constant 0 : i32
    %c0_i32_1 = arith.constant 0 : i32
    return %arg0, %c0_i32, %c0_i32_0 : i32, i32, i32
  }
}

</mosaic_0001>

<llo_original>
// kernel: _sample_loop.1
$region0: #{_sample_loop.1}
  #allocation0 [shape = 'u32[]', space=smem, size = 0x4, offset = 0x4, fixed_abs, tag = 'smem constant byte address 0x4 - core index']
  #allocation1 [shape = 'u32[144,128]{1,0:T(1,128)}', space=vmem, size = 0x12000, scoped, tag = 'internal scratch']
  #allocation2 [shape = 'f32[3,512]{1,0:T(4,128)}', space=vmem, size = 0x2000, scoped, tag = 'scratch operand']
  %s0 = inlined_call_operand.vmem [shape: f32[8,4], index: 0, kind: input, shape index: {}]
  %s1 = inlined_call_operand.vmem [shape: f32[3,512], index: 1, kind: input, shape index: {}]
  %s2 = inlined_call_operand.vmem [shape: f32[8,32,1], index: 2, kind: input, shape index: {}]
  %s3 = inlined_call_operand.vmem [shape: f32[32,512], index: 3, kind: input, shape index: {}]
  %s4 = inlined_call_operand.vmem [shape: f32[32,512], index: 4, kind: input, shape index: {}]
  %s5 = inlined_call_operand.vmem [shape: f32[1,512], index: 5, kind: input, shape index: {}]
  %s6 = inlined_call_operand.vmem [shape: f32[32,3], index: 6, kind: input, shape index: {}]
  %s7 = inlined_call_operand.vmem [shape: f32[3,32], index: 7, kind: input, shape index: {}]
  %s8 = inlined_call_operand.vmem [shape: f32[3,1], index: 8, kind: input, shape index: {}]
  %s9 = inlined_call_operand.vmem [shape: f32[8,3,512], index: 9, kind: output, shape index: {}]
  %s10 = sld [smem:[#allocation0]]
  $region77: #{_sample_loop.1} parent=0
    _
  %s12 = ssub.s32 1, %s10
  %s13 = scalar_select 0, %s12, %s10
  $region1: #{_sample_loop.1} parent=0
    #allocation3 [shape = 'u8[4096]{0}', space=smem, size = 0x1000, scoped, tag = 'input window, operand 0, single buffered']
    #allocation4 [shape = 's32[2]{0}', space=sflag, size = 0x8, scoped, tag = 'scoped memory for _sample_loop.1']
    %14 = vsyncpa [#allocation4], 0
    loop: start=0, step=1, limit=10
    $region2: #{_sample_loop.1} parent=1 // loop_pre_header
      _
    $region3: #{_sample_loop.1} parent=1 // loop_header
      %s16 = sphi 0, %s20
      %p17 = scmp.ge.s32.totalorder %s16, 10
      %s24 = sphi 0, %s24
      %s26 = sphi 0, %s24
      %s27 = sphi 0, %s26
      %s41 = sphi 0, %s27
      %s45 = sphi 0, %s45
      %s47 = sphi 0, %s45
      %s48 = sphi 0, %s47
      %s62 = sphi 0, %s48
      %s66 = sphi 0, %s66
      %s68 = sphi 0, %s66
      %s69 = sphi 0, %s68
      %s83 = sphi 0, %s69
      %s87 = sphi 0, %s87
      %s89 = sphi 0, %s87
      %s90 = sphi 0, %s89
      %s104 = sphi 0, %s90
      %s108 = sphi 0, %s108
      %s110 = sphi 0, %s108
      %s111 = sphi 0, %s110
      %s125 = sphi 0, %s111
      %s129 = sphi 0, %s129
      %s131 = sphi 0, %s129
      %s132 = sphi 0, %s131
      %s146 = sphi 0, %s132
      %s150 = sphi 0, %s150
      %s152 = sphi 0, %s150
      %s153 = sphi 0, %s152
      %s167 = sphi 0, %s153
      %s171 = sphi 0, %s171
      %s173 = sphi 0, %s171
      %s174 = sphi 0, %s173
      %s188 = sphi 0, %s174
      %s192 = sphi 0, %s192
      %s194 = sphi 0, %s192
      %s195 = sphi 0, %s194
      %s209 = sphi 0, %s195
      %s215 = sphi 0, %s217
      %s218 = sphi 0, %s215
      %s219 = sphi 0, %s218
      %s235 = sphi 0, %s219
    $region4: #{_sample_loop.1} parent=1 // loop_header_branch
      %19 = sbr.rel (%p17) target = $region8
    $region5: #{_sample_loop.1} parent=1 // loop_body
      %s21 = ssub.s32 %s16, 1
      %s22 = ssub.s32 %s16, 2
      %s23 = sadd.s32 %s16, 1
      %s25 = sadd.s32 %s24, 1
      %p28 = scmp.eq.s32.totalorder %s16, 7
      %p29 = scmp.ne.s32.totalorder %s24, %s26
      %p30 = scmp.eq.s32.totalorder %s16, 0
      %p31 = por %p29, %p30
      %p32 = scmp.ne.s32.totalorder %s24, %s26
      %p33 = scmp.eq.s32.totalorder %s21, 7
      %p34 = por %p32, %p33
      %p35 = scmp.ne.s32.totalorder %s26, %s27
      %p36 = scmp.eq.s32.totalorder %s21, 0
      %p37 = por %p35, %p36
      %p38 = scmp.ne.s32.totalorder %s26, %s27
      %p39 = scmp.eq.s32.totalorder %s22, 7
      %p40 = por %p38, %p39
      %p42 = scmp.ne.s32.totalorder %s27, %s41
      %p43 = scmp.eq.s32.totalorder %s22, 0
      %p44 = por %p42, %p43
      %s46 = sadd.s32 %s45, 1
      %p49 = scmp.eq.s32.totalorder %s16, 7
      %p50 = scmp.ne.s32.totalorder %s45, %s47
      %p51 = scmp.eq.s32.totalorder %s16, 0
      %p52 = por %p50, %p51
      %p53 = scmp.ne.s32.totalorder %s45, %s47
      %p54 = scmp.eq.s32.totalorder %s21, 7
      %p55 = por %p53, %p54
      %p56 = scmp.ne.s32.totalorder %s47, %s48
      %p57 = scmp.eq.s32.totalorder %s21, 0
      %p58 = por %p56, %p57
      %p59 = scmp.ne.s32.totalorder %s47, %s48
      %p60 = scmp.eq.s32.totalorder %s22, 7
      %p61 = por %p59, %p60
      %p63 = scmp.ne.s32.totalorder %s48, %s62
      %p64 = scmp.eq.s32.totalorder %s22, 0
      %p65 = por %p63, %p64
      %s67 = sadd.s32 %s66, 1
      %p70 = scmp.eq.s32.totalorder %s16, 7
      %p71 = scmp.ne.s32.totalorder %s66, %s68
      %p72 = scmp.eq.s32.totalorder %s16, 0
      %p73 = por %p71, %p72
      %p74 = scmp.ne.s32.totalorder %s66, %s68
      %p75 = scmp.eq.s32.totalorder %s21, 7
      %p76 = por %p74, %p75
      %p77 = scmp.ne.s32.totalorder %s68, %s69
      %p78 = scmp.eq.s32.totalorder %s21, 0
      %p79 = por %p77, %p78
      %p80 = scmp.ne.s32.totalorder %s68, %s69
      %p81 = scmp.eq.s32.totalorder %s22, 7
      %p82 = por %p80, %p81
      %p84 = scmp.ne.s32.totalorder %s69, %s83
      %p85 = scmp.eq.s32.totalorder %s22, 0
      %p86 = por %p84, %p85
      %s88 = sadd.s32 %s87, 1
      %p91 = scmp.eq.s32.totalorder %s16, 7
      %p92 = scmp.ne.s32.totalorder %s87, %s89
      %p93 = scmp.eq.s32.totalorder %s16, 0
      %p94 = por %p92, %p93
      %p95 = scmp.ne.s32.totalorder %s87, %s89
      %p96 = scmp.eq.s32.totalorder %s21, 7
      %p97 = por %p95, %p96
      %p98 = scmp.ne.s32.totalorder %s89, %s90
      %p99 = scmp.eq.s32.totalorder %s21, 0
      %p100 = por %p98, %p99
      %p101 = scmp.ne.s32.totalorder %s89, %s90
      %p102 = scmp.eq.s32.totalorder %s22, 7
      %p103 = por %p101, %p102
      %p105 = scmp.ne.s32.totalorder %s90, %s104
      %p106 = scmp.eq.s32.totalorder %s22, 0
      %p107 = por %p105, %p106
      %s109 = sadd.s32 %s108, 1
      %p112 = scmp.eq.s32.totalorder %s16, 7
      %p113 = scmp.ne.s32.totalorder %s108, %s110
      %p114 = scmp.eq.s32.totalorder %s16, 0
      %p115 = por %p113, %p114
      %p116 = scmp.ne.s32.totalorder %s108, %s110
      %p117 = scmp.eq.s32.totalorder %s21, 7
      %p118 = por %p116, %p117
      %p119 = scmp.ne.s32.totalorder %s110, %s111
      %p120 = scmp.eq.s32.totalorder %s21, 0
      %p121 = por %p119, %p120
      %p122 = scmp.ne.s32.totalorder %s110, %s111
      %p123 = scmp.eq.s32.totalorder %s22, 7
      %p124 = por %p122, %p123
      %p126 = scmp.ne.s32.totalorder %s111, %s125
      %p127 = scmp.eq.s32.totalorder %s22, 0
      %p128 = por %p126, %p127
      %s130 = sadd.s32 %s129, 1
      %p133 = scmp.eq.s32.totalorder %s16, 7
      %p134 = scmp.ne.s32.totalorder %s129, %s131
      %p135 = scmp.eq.s32.totalorder %s16, 0
      %p136 = por %p134, %p135
      %p137 = scmp.ne.s32.totalorder %s129, %s131
      %p138 = scmp.eq.s32.totalorder %s21, 7
      %p139 = por %p137, %p138
      %p140 = scmp.ne.s32.totalorder %s131, %s132
      %p141 = scmp.eq.s32.totalorder %s21, 0
      %p142 = por %p140, %p141
      %p143 = scmp.ne.s32.totalorder %s131, %s132
      %p144 = scmp.eq.s32.totalorder %s22, 7
      %p145 = por %p143, %p144
      %p147 = scmp.ne.s32.totalorder %s132, %s146
      %p148 = scmp.eq.s32.totalorder %s22, 0
      %p149 = por %p147, %p148
      %s151 = sadd.s32 %s150, 1
      %p154 = scmp.eq.s32.totalorder %s16, 7
      %p155 = scmp.ne.s32.totalorder %s150, %s152
      %p156 = scmp.eq.s32.totalorder %s16, 0
      %p157 = por %p155, %p156
      %p158 = scmp.ne.s32.totalorder %s150, %s152
      %p159 = scmp.eq.s32.totalorder %s21, 7
      %p160 = por %p158, %p159
      %p161 = scmp.ne.s32.totalorder %s152, %s153
      %p162 = scmp.eq.s32.totalorder %s21, 0
      %p163 = por %p161, %p162
      %p164 = scmp.ne.s32.totalorder %s152, %s153
      %p165 = scmp.eq.s32.totalorder %s22, 7
      %p166 = por %p164, %p165
      %p168 = scmp.ne.s32.totalorder %s153, %s167
      %p169 = scmp.eq.s32.totalorder %s22, 0
      %p170 = por %p168, %p169
      %s172 = sadd.s32 %s171, 1
      %p175 = scmp.eq.s32.totalorder %s16, 7
      %p176 = scmp.ne.s32.totalorder %s171, %s173
      %p177 = scmp.eq.s32.totalorder %s16, 0
      %p178 = por %p176, %p177
      %p179 = scmp.ne.s32.totalorder %s171, %s173
      %p180 = scmp.eq.s32.totalorder %s21, 7
      %p181 = por %p179, %p180
      %p182 = scmp.ne.s32.totalorder %s173, %s174
      %p183 = scmp.eq.s32.totalorder %s21, 0
      %p184 = por %p182, %p183
      %p185 = scmp.ne.s32.totalorder %s173, %s174
      %p186 = scmp.eq.s32.totalorder %s22, 7
      %p187 = por %p185, %p186
      %p189 = scmp.ne.s32.totalorder %s174, %s188
      %p190 = scmp.eq.s32.totalorder %s22, 0
      %p191 = por %p189, %p190
      %s193 = sadd.s32 %s192, 1
      %p196 = scmp.eq.s32.totalorder %s16, 7
      %p197 = scmp.ne.s32.totalorder %s192, %s194
      %p198 = scmp.eq.s32.totalorder %s16, 0
      %p199 = por %p197, %p198
      %p200 = scmp.ne.s32.totalorder %s192, %s194
      %p201 = scmp.eq.s32.totalorder %s21, 7
      %p202 = por %p200, %p201
      %p203 = scmp.ne.s32.totalorder %s194, %s195
      %p204 = scmp.eq.s32.totalorder %s21, 0
      %p205 = por %p203, %p204
      %p206 = scmp.ne.s32.totalorder %s194, %s195
      %p207 = scmp.eq.s32.totalorder %s22, 7
      %p208 = por %p206, %p207
      %p210 = scmp.ne.s32.totalorder %s195, %s209
      %p211 = scmp.eq.s32.totalorder %s22, 0
      %p212 = por %p210, %p211
      %s213 = ssub.s32 %s16, %s23
      %p214 = scmp.eq.s32.totalorder %s213, 0
      %s216 = sadd.s32 %s215, 1
      %s217 = scalar_select %p214, %s215, %s216
      %p220 = pneg %p214
      %p221 = scmp.eq.s32.totalorder %s16, 7
      %p222 = por %p220, %p221
      %p223 = scmp.ne.s32.totalorder %s215, %s218
      %p224 = scmp.eq.s32.totalorder %s16, 0
      %p225 = por %p223, %p224
      %p226 = scmp.ne.s32.totalorder %s215, %s218
      %p227 = scmp.eq.s32.totalorder %s21, 7
      %p228 = por %p226, %p227
      %p229 = scmp.ne.s32.totalorder %s218, %s219
      %p230 = scmp.eq.s32.totalorder %s21, 0
      %p231 = por %p229, %p230
      %p232 = scmp.ne.s32.totalorder %s218, %s219
      %p233 = scmp.eq.s32.totalorder %s22, 7
      %p234 = por %p232, %p233
      %p236 = scmp.ne.s32.totalorder %s219, %s235
      %p237 = scmp.eq.s32.totalorder %s22, 0
      %p238 = por %p236, %p237
      %p239 = scmp.le.s32.totalorder 1, %s16
      %p240 = scmp.lt.s32.totalorder %s16, 9
      %p241 = pnand %p239, %p240
      %p242 = pneg %p241
      // Predicated region
      $region9: #{_sample_loop.1} parent=5 // pred_check
        _
      $region10: #{_sample_loop.1} parent=5 // pred_check_branch
        %244 = sbr.rel (%p241) target = $region12
      $region11: #{_sample_loop.1} parent=5 // pred_region
        %s245 = ssub.s32 %s16, 1
        // Predicated region
        $region13: #{_sample_loop.1} parent=11 // pred_check
          %p246 = pneg %p37
        $region14: #{_sample_loop.1} parent=11 // pred_check_branch
          %248 = sbr.rel (%p246) target = $region16
        $region15: #{_sample_loop.1} parent=11 // pred_region
          %s250 = ssub.s32 128, 128
          %251 = vsyncadd [#allocation4], %s250
          %s253 = sshll.u32 %s0, 4
          %s254 = int_to_ptr.vmem [resolvable:$true] %s253
          %256 = dma.vmem_to_smem %s254, 128, [#allocation3], [#allocation4]
        $region16: #{_sample_loop.1} parent=11 // pred_fallthru
          _
        // Predicated region
        $region17: #{_sample_loop.1} parent=11 // pred_check
          %p257 = pneg %p58
        $region18: #{_sample_loop.1} parent=11 // pred_check_branch
          %259 = sbr.rel (%p257) target = $region20
        $region19: #{_sample_loop.1} parent=11 // pred_region
          _
        $region20: #{_sample_loop.1} parent=11 // pred_fallthru
          _
        // Predicated region
        $region21: #{_sample_loop.1} parent=11 // pred_check
          %p260 = pneg %p79
        $region22: #{_sample_loop.1} parent=11 // pred_check_branch
          %262 = sbr.rel (%p260) target = $region24
        $region23: #{_sample_loop.1} parent=11 // pred_region
          _
        $region24: #{_sample_loop.1} parent=11 // pred_fallthru
          _
        // Predicated region
        $region25: #{_sample_loop.1} parent=11 // pred_check
          %p263 = pneg %p100
        $region26: #{_sample_loop.1} parent=11 // pred_check_branch
          %265 = sbr.rel (%p263) target = $region28
        $region27: #{_sample_loop.1} parent=11 // pred_region
          _
        $region28: #{_sample_loop.1} parent=11 // pred_fallthru
          _
        // Predicated region
        $region29: #{_sample_loop.1} parent=11 // pred_check
          %p266 = pneg %p121
        $region30: #{_sample_loop.1} parent=11 // pred_check_branch
          %268 = sbr.rel (%p266) target = $region32
        $region31: #{_sample_loop.1} parent=11 // pred_region
          _
        $region32: #{_sample_loop.1} parent=11 // pred_fallthru
          _
        // Predicated region
        $region33: #{_sample_loop.1} parent=11 // pred_check
          %p269 = pneg %p142
        $region34: #{_sample_loop.1} parent=11 // pred_check_branch
          %271 = sbr.rel (%p269) target = $region36
        $region35: #{_sample_loop.1} parent=11 // pred_region
          _
        $region36: #{_sample_loop.1} parent=11 // pred_fallthru
          _
        // Predicated region
        $region37: #{_sample_loop.1} parent=11 // pred_check
          %p272 = pneg %p163
        $region38: #{_sample_loop.1} parent=11 // pred_check_branch
          %274 = sbr.rel (%p272) target = $region40
        $region39: #{_sample_loop.1} parent=11 // pred_region
          _
        $region40: #{_sample_loop.1} parent=11 // pred_fallthru
          _
        // Predicated region
        $region41: #{_sample_loop.1} parent=11 // pred_check
          %p275 = pneg %p184
        $region42: #{_sample_loop.1} parent=11 // pred_check_branch
          %277 = sbr.rel (%p275) target = $region44
        $region43: #{_sample_loop.1} parent=11 // pred_region
          _
        $region44: #{_sample_loop.1} parent=11 // pred_fallthru
          _
        // Predicated region
        $region45: #{_sample_loop.1} parent=11 // pred_check
          %p278 = pneg %p205
        $region46: #{_sample_loop.1} parent=11 // pred_check_branch
          %280 = sbr.rel (%p278) target = $region48
        $region47: #{_sample_loop.1} parent=11 // pred_region
          _
        $region48: #{_sample_loop.1} parent=11 // pred_fallthru
          _
      $region12: #{_sample_loop.1} parent=5 // pred_fallthru
        _
      %p281 = scmp.lt.s32.totalorder %s16, 8
      // Predicated region
      $region49: #{_sample_loop.1} parent=5 // pred_check
        %p282 = pneg %p281
      $region50: #{_sample_loop.1} parent=5 // pred_check_branch
        %284 = sbr.rel (%p282) target = $region52
      $region51: #{_sample_loop.1} parent=5 // pred_region
        _
      $region52: #{_sample_loop.1} parent=5 // pred_fallthru
        _
      %p285 = scmp.le.s32.totalorder 1, %s16
      %p286 = scmp.lt.s32.totalorder %s16, 9
      %p287 = pnand %p285, %p286
      %p288 = pneg %p287
      // Predicated region
      $region53: #{_sample_loop.1} parent=5 // pred_check
        _
      $region54: #{_sample_loop.1} parent=5 // pred_check_branch
        %290 = sbr.rel (%p287) target = $region56
      $region55: #{_sample_loop.1} parent=5 // pred_region
        %s291 = ssub.s32 %s16, 1
        // Predicated region
        $region57: #{_sample_loop.1} parent=55 // pred_check
          %p292 = pneg %p37
        $region58: #{_sample_loop.1} parent=55 // pred_check_branch
          %294 = sbr.rel (%p292) target = $region60
        $region59: #{_sample_loop.1} parent=55 // pred_region
          %295 = dma.done [#allocation4], 128
        $region60: #{_sample_loop.1} parent=55 // pred_fallthru
          _
        %296 = sfence
        %p297 = pneg %p37
        %p298 = pneg %p34
        %p299 = pneg %p58
        %p300 = pneg %p55
        %p301 = pneg %p79
        %p302 = pneg %p76
        %p303 = pneg %p100
        %p304 = pneg %p97
        %p305 = pneg %p121
        %p306 = pneg %p118
        %p307 = pneg %p142
        %p308 = pneg %p139
        %p309 = pneg %p163
        %p310 = pneg %p160
        %p311 = pneg %p184
        %p312 = pneg %p181
        %p313 = pneg %p205
        %p314 = pneg %p202
        %p315 = pneg %p231
        %p316 = pneg %p228
        %p317 = scmp.lt.s32.totalorder %s21, 7
        %s318 = scalar_select %p317, %s21, 7
        %s319 = smul.addr %s318, 4
        %s320 = smul.addr %s319, 4
        %s321 = scalar_lea.vmem %s9, %s320
        %p322 = scmp.lt.s32.totalorder %s21, 7
        %s323 = scalar_select %p322, %s21, 7
        %s324 = smul.addr %s323, 4
        %s325 = smul.addr %s324, 4
        %s326 = scalar_lea.vmem %s9, %s325
        %p327 = scmp.eq.s32.totalorder %s21, 0
        // Predicated region
        $region61: #{_sample_loop.1} parent=55 // pred_check
          %p328 = pneg %p327
        $region62: #{_sample_loop.1} parent=55 // pred_check_branch
          %330 = sbr.rel (%p328) target = $region64
        $region63: #{_sample_loop.1} parent=55 // pred_region
          %v331 = vld [vmem:[%s1] sm:$0x77]
          %v332 = vld [vmem:[%s1 + $0x8] sm:$0x77]
          %333 = vst [vmem:[#allocation2] sm:$0x77] %v331
          %334 = vst [vmem:[#allocation2 + $0x8] sm:$0x77] %v332
        $region64: #{_sample_loop.1} parent=55 // pred_fallthru
          _
        %s335 = smul.u32 %s21, 128
        %s336 = sld [smem:[#allocation3 + %s335]]
        %s337 = sadd.s32 %s335, 1
        %s338 = sld [smem:[#allocation3 + %s337]]
        %s339 = sadd.s32 %s335, 2
        %s340 = sld [smem:[#allocation3 + %s339]]
        %s341 = sadd.s32 %s335, 3
        %s342 = sld [smem:[#allocation3 + %s341]]
        %v343 = vstv %s338
        %v344 = vrcp.pop %v343
        %s345 = vtos %v344
        %v346 = vld [vmem:[#allocation2] sm:$0x77]
        %v347 = vld [vmem:[#allocation2 + $0x8] sm:$0x77]
        %v348 = vld [vmem:[%s6] sm:$0xff]
        %v349 = vld [vmem:[%s6 + $0x8] sm:$0xff]
        %v350 = vld [vmem:[%s6 + $0x10] sm:$0xff]
        %v351 = vld [vmem:[%s6 + $0x18] sm:$0xff]
        %353 = vset.pattern.permute.xlu0 0
        %354 = vperm.xlu0 %353, %v348
        %v355 = vpop.permute.xlu0 %354
        %358 = vset.pattern.permute.xlu0 0
        %359 = vperm.xlu0 %358, %v349
        %v360 = vpop.permute.xlu0 %359
        %363 = vset.pattern.permute.xlu0 0
        %364 = vperm.xlu0 %363, %v350
        %v365 = vpop.permute.xlu0 %364
        %368 = vset.pattern.permute.xlu0 0
        %369 = vperm.xlu0 %368, %v351
        %v370 = vpop.permute.xlu0 %369
        %v374 = vlaneseq
        %v375 = vshrl.u32 %v374, 7
        %v376 = vsub.s32 0, %v375
        %v377 = vrot.slane %v346, %v376
        %v378 = vlaneseq
        %v379 = vshrl.u32 %v378, 7
        %v380 = vsub.s32 4, %v379
        %v381 = vrot.slane %v346, %v380
        %v382 = vlaneseq
        %v383 = vshrl.u32 %v382, 7
        %v384 = vsub.s32 0, %v383
        %v385 = vrot.slane %v347, %v384
        %v386 = vlaneseq
        %v387 = vshrl.u32 %v386, 7
        %v388 = vsub.s32 4, %v387
        %v389 = vrot.slane %v347, %v388
        %v394 = vlaneseq
        %v395 = vshrl.u32 %v394, 7
        %v396 = vsub.s32 0, %v395
        %v397 = vrot.slane %v377, %v396
        %v398 = vlaneseq
        %v399 = vshrl.u32 %v398, 7
        %v400 = vsub.s32 0, %v399
        %v401 = vrot.slane %v381, %v400
        %v402 = vlaneseq
        %v403 = vshrl.u32 %v402, 7
        %v404 = vsub.s32 0, %v403
        %v405 = vrot.slane %v385, %v404
        %v406 = vlaneseq
        %v407 = vshrl.u32 %v406, 7
        %v408 = vsub.s32 0, %v407
        %v409 = vrot.slane %v389, %v408
        %v410 = vmul.f32 %v355, %v397
        %v411 = vmul.f32 %v355, %v401
        %v412 = vmul.f32 %v355, %v405
        %v413 = vmul.f32 %v355, %v409
        %v414 = vmul.f32 %v360, %v397
        %v415 = vmul.f32 %v360, %v401
        %v416 = vmul.f32 %v360, %v405
        %v417 = vmul.f32 %v360, %v409
        %v418 = vmul.f32 %v365, %v397
        %v419 = vmul.f32 %v365, %v401
        %v420 = vmul.f32 %v365, %v405
        %v421 = vmul.f32 %v365, %v409
        %v422 = vmul.f32 %v370, %v397
        %v423 = vmul.f32 %v370, %v401
        %v424 = vmul.f32 %v370, %v405
        %v425 = vmul.f32 %v370, %v409
        %426 = vset.pattern.permute.xlu0 1
        %427 = vperm.xlu0 %426, %v348
        %v428 = vpop.permute.xlu0 %427
        %430 = vset.pattern.permute.xlu0 1
        %431 = vperm.xlu0 %430, %v349
        %v432 = vpop.permute.xlu0 %431
        %434 = vset.pattern.permute.xlu0 1
        %435 = vperm.xlu0 %434, %v350
        %v436 = vpop.permute.xlu0 %435
        %438 = vset.pattern.permute.xlu0 1
        %439 = vperm.xlu0 %438, %v351
        %v440 = vpop.permute.xlu0 %439
        %v442 = vlaneseq
        %v443 = vshrl.u32 %v442, 7
        %v444 = vsub.s32 1, %v443
        %v445 = vrot.slane %v346, %v444
        %v446 = vlaneseq
        %v447 = vshrl.u32 %v446, 7
        %v448 = vsub.s32 5, %v447
        %v449 = vrot.slane %v346, %v448
        %v450 = vlaneseq
        %v451 = vshrl.u32 %v450, 7
        %v452 = vsub.s32 1, %v451
        %v453 = vrot.slane %v347, %v452
        %v454 = vlaneseq
        %v455 = vshrl.u32 %v454, 7
        %v456 = vsub.s32 5, %v455
        %v457 = vrot.slane %v347, %v456
        %v462 = vlaneseq
        %v463 = vshrl.u32 %v462, 7
        %v464 = vsub.s32 1, %v463
        %v465 = vrot.slane %v445, %v464
        %v466 = vlaneseq
        %v467 = vshrl.u32 %v466, 7
        %v468 = vsub.s32 1, %v467
        %v469 = vrot.slane %v449, %v468
        %v470 = vlaneseq
        %v471 = vshrl.u32 %v470, 7
        %v472 = vsub.s32 1, %v471
        %v473 = vrot.slane %v453, %v472
        %v474 = vlaneseq
        %v475 = vshrl.u32 %v474, 7
        %v476 = vsub.s32 1, %v475
        %v477 = vrot.slane %v457, %v476
        %v478 = vmul.f32 %v428, %v465
        %v479 = vmul.f32 %v428, %v469
        %v480 = vmul.f32 %v428, %v473
        %v481 = vmul.f32 %v428, %v477
        %v482 = vmul.f32 %v432, %v465
        %v483 = vmul.f32 %v432, %v469
        %v484 = vmul.f32 %v432, %v473
        %v485 = vmul.f32 %v432, %v477
        %v486 = vmul.f32 %v436, %v465
        %v487 = vmul.f32 %v436, %v469
        %v488 = vmul.f32 %v436, %v473
        %v489 = vmul.f32 %v436, %v477
        %v490 = vmul.f32 %v440, %v465
        %v491 = vmul.f32 %v440, %v469
        %v492 = vmul.f32 %v440, %v473
        %v493 = vmul.f32 %v440, %v477
        %v494 = vadd.f32 %v410, %v478
        %v495 = vadd.f32 %v411, %v479
        %v496 = vadd.f32 %v412, %v480
        %v497 = vadd.f32 %v413, %v481
        %v498 = vadd.f32 %v414, %v482
        %v499 = vadd.f32 %v415, %v483
        %v500 = vadd.f32 %v416, %v484
        %v501 = vadd.f32 %v417, %v485
        %v502 = vadd.f32 %v418, %v486
        %v503 = vadd.f32 %v419, %v487
        %v504 = vadd.f32 %v420, %v488
        %v505 = vadd.f32 %v421, %v489
        %v506 = vadd.f32 %v422, %v490
        %v507 = vadd.f32 %v423, %v491
        %v508 = vadd.f32 %v424, %v492
        %v509 = vadd.f32 %v425, %v493
        %510 = vset.pattern.permute.xlu0 2
        %511 = vperm.xlu0 %510, %v348
        %v512 = vpop.permute.xlu0 %511
        %514 = vset.pattern.permute.xlu0 2
        %515 = vperm.xlu0 %514, %v349
        %v516 = vpop.permute.xlu0 %515
        %518 = vset.pattern.permute.xlu0 2
        %519 = vperm.xlu0 %518, %v350
        %v520 = vpop.permute.xlu0 %519
        %522 = vset.pattern.permute.xlu0 2
        %523 = vperm.xlu0 %522, %v351
        %v524 = vpop.permute.xlu0 %523
        %v526 = vlaneseq
        %v527 = vshrl.u32 %v526, 7
        %v528 = vsub.s32 2, %v527
        %v529 = vrot.slane %v346, %v528
        %v530 = vlaneseq
        %v531 = vshrl.u32 %v530, 7
        %v532 = vsub.s32 6, %v531
        %v533 = vrot.slane %v346, %v532
        %v534 = vlaneseq
        %v535 = vshrl.u32 %v534, 7
        %v536 = vsub.s32 2, %v535
        %v537 = vrot.slane %v347, %v536
        %v538 = vlaneseq
        %v539 = vshrl.u32 %v538, 7
        %v540 = vsub.s32 6, %v539
        %v541 = vrot.slane %v347, %v540
        %v546 = vlaneseq
        %v547 = vshrl.u32 %v546, 7
        %v548 = vsub.s32 2, %v547
        %v549 = vrot.slane %v529, %v548
        %v550 = vlaneseq
        %v551 = vshrl.u32 %v550, 7
        %v552 = vsub.s32 2, %v551
        %v553 = vrot.slane %v533, %v552
        %v554 = vlaneseq
        %v555 = vshrl.u32 %v554, 7
        %v556 = vsub.s32 2, %v555
        %v557 = vrot.slane %v537, %v556
        %v558 = vlaneseq
        %v559 = vshrl.u32 %v558, 7
        %v560 = vsub.s32 2, %v559
        %v561 = vrot.slane %v541, %v560
        %v562 = vmul.f32 %v512, %v549
        %v563 = vmul.f32 %v512, %v553
        %v564 = vmul.f32 %v512, %v557
        %v565 = vmul.f32 %v512, %v561
        %v566 = vmul.f32 %v516, %v549
        %v567 = vmul.f32 %v516, %v553
        %v568 = vmul.f32 %v516, %v557
        %v569 = vmul.f32 %v516, %v561
        %v570 = vmul.f32 %v520, %v549
        %v571 = vmul.f32 %v520, %v553
        %v572 = vmul.f32 %v520, %v557
        %v573 = vmul.f32 %v520, %v561
        %v574 = vmul.f32 %v524, %v549
        %v575 = vmul.f32 %v524, %v553
        %v576 = vmul.f32 %v524, %v557
        %v577 = vmul.f32 %v524, %v561
        %v578 = vadd.f32 %v494, %v562
        %v579 = vadd.f32 %v495, %v563
        %v580 = vadd.f32 %v496, %v564
        %v581 = vadd.f32 %v497, %v565
        %v582 = vadd.f32 %v498, %v566
        %v583 = vadd.f32 %v499, %v567
        %v584 = vadd.f32 %v500, %v568
        %v585 = vadd.f32 %v501, %v569
        %v586 = vadd.f32 %v502, %v570
        %v587 = vadd.f32 %v503, %v571
        %v588 = vadd.f32 %v504, %v572
        %v589 = vadd.f32 %v505, %v573
        %v590 = vadd.f32 %v506, %v574
        %v591 = vadd.f32 %v507, %v575
        %v592 = vadd.f32 %v508, %v576
        %v593 = vadd.f32 %v509, %v577
        %s594 = smul.u32 %s21, 32
        %s595 = scalar_lea.vmem %s2, %s594
        %v596 = vld [vmem:[%s595] sm:$0xff]
        %v597 = vld [vmem:[%s595 + $0x8] sm:$0xff]
        %v598 = vld [vmem:[%s595 + $0x10] sm:$0xff]
        %v599 = vld [vmem:[%s595 + $0x18] sm:$0xff]
        %601 = vset.pattern.permute.xlu0 0
        %602 = vperm.xlu0 %601, %v596
        %v603 = vpop.permute.xlu0 %602
        %606 = vset.pattern.permute.xlu0 0
        %607 = vperm.xlu0 %606, %v597
        %v608 = vpop.permute.xlu0 %607
        %611 = vset.pattern.permute.xlu0 0
        %612 = vperm.xlu0 %611, %v598
        %v613 = vpop.permute.xlu0 %612
        %616 = vset.pattern.permute.xlu0 0
        %617 = vperm.xlu0 %616, %v599
        %v618 = vpop.permute.xlu0 %617
        %v620 = vadd.f32 %v578, %v603
        %v621 = vadd.f32 %v579, %v603
        %v622 = vadd.f32 %v580, %v603
        %v623 = vadd.f32 %v581, %v603
        %v624 = vadd.f32 %v582, %v608
        %v625 = vadd.f32 %v583, %v608
        %v626 = vadd.f32 %v584, %v608
        %v627 = vadd.f32 %v585, %v608
        %v628 = vadd.f32 %v586, %v613
        %v629 = vadd.f32 %v587, %v613
        %v630 = vadd.f32 %v588, %v613
        %v631 = vadd.f32 %v589, %v613
        %v632 = vadd.f32 %v590, %v618
        %v633 = vadd.f32 %v591, %v618
        %v634 = vadd.f32 %v592, %v618
        %v635 = vadd.f32 %v593, %v618
        %v636 = vld [vmem:[%s3] sm:$0xff]
        %v637 = vld [vmem:[%s3 + $0x8] sm:$0xff]
        %v638 = vld [vmem:[%s3 + $0x10] sm:$0xff]
        %v639 = vld [vmem:[%s3 + $0x18] sm:$0xff]
        %v640 = vld [vmem:[%s3 + $0x20] sm:$0xff]
        %v641 = vld [vmem:[%s3 + $0x28] sm:$0xff]
        %v642 = vld [vmem:[%s3 + $0x30] sm:$0xff]
        %v643 = vld [vmem:[%s3 + $0x38] sm:$0xff]
        %v644 = vld [vmem:[%s3 + $0x40] sm:$0xff]
        %v645 = vld [vmem:[%s3 + $0x48] sm:$0xff]
        %v646 = vld [vmem:[%s3 + $0x50] sm:$0xff]
        %v647 = vld [vmem:[%s3 + $0x58] sm:$0xff]
        %v648 = vld [vmem:[%s3 + $0x60] sm:$0xff]
        %v649 = vld [vmem:[%s3 + $0x68] sm:$0xff]
        %v650 = vld [vmem:[%s3 + $0x70] sm:$0xff]
        %v651 = vld [vmem:[%s3 + $0x78] sm:$0xff]
        %v652 = vadd.f32 %v620, %v636
        %v653 = vadd.f32 %v621, %v637
        %v654 = vadd.f32 %v622, %v638
        %v655 = vadd.f32 %v623, %v639
        %v656 = vadd.f32 %v624, %v640
        %v657 = vadd.f32 %v625, %v641
        %v658 = vadd.f32 %v626, %v642
        %v659 = vadd.f32 %v627, %v643
        %v660 = vadd.f32 %v628, %v644
        %v661 = vadd.f32 %v629, %v645
        %v662 = vadd.f32 %v630, %v646
        %v663 = vadd.f32 %v631, %v647
        %v664 = vadd.f32 %v632, %v648
        %v665 = vadd.f32 %v633, %v649
        %v666 = vadd.f32 %v634, %v650
        %v667 = vadd.f32 %v635, %v651
        %v668 = vld [vmem:[%s4] sm:$0xff]
        %v669 = vld [vmem:[%s4 + $0x8] sm:$0xff]
        %v670 = vld [vmem:[%s4 + $0x10] sm:$0xff]
        %v671 = vld [vmem:[%s4 + $0x18] sm:$0xff]
        %v672 = vld [vmem:[%s4 + $0x20] sm:$0xff]
        %v673 = vld [vmem:[%s4 + $0x28] sm:$0xff]
        %v674 = vld [vmem:[%s4 + $0x30] sm:$0xff]
        %v675 = vld [vmem:[%s4 + $0x38] sm:$0xff]
        %v676 = vld [vmem:[%s4 + $0x40] sm:$0xff]
        %v677 = vld [vmem:[%s4 + $0x48] sm:$0xff]
        %v678 = vld [vmem:[%s4 + $0x50] sm:$0xff]
        %v679 = vld [vmem:[%s4 + $0x58] sm:$0xff]
        %v680 = vld [vmem:[%s4 + $0x60] sm:$0xff]
        %v681 = vld [vmem:[%s4 + $0x68] sm:$0xff]
        %v682 = vld [vmem:[%s4 + $0x70] sm:$0xff]
        %v683 = vld [vmem:[%s4 + $0x78] sm:$0xff]
        %v684 = vadd.f32 %v620, %v668
        %v685 = vadd.f32 %v621, %v669
        %v686 = vadd.f32 %v622, %v670
        %v687 = vadd.f32 %v623, %v671
        %v688 = vadd.f32 %v624, %v672
        %v689 = vadd.f32 %v625, %v673
        %v690 = vadd.f32 %v626, %v674
        %v691 = vadd.f32 %v627, %v675
        %v692 = vadd.f32 %v628, %v676
        %v693 = vadd.f32 %v629, %v677
        %v694 = vadd.f32 %v630, %v678
        %v695 = vadd.f32 %v631, %v679
        %v696 = vadd.f32 %v632, %v680
        %v697 = vadd.f32 %v633, %v681
        %v698 = vadd.f32 %v634, %v682
        %v699 = vadd.f32 %v635, %v683
        %v700 = vxor.u32 %v652, 2147483648
        %v701 = vxor.u32 %v653, 2147483648
        %v702 = vxor.u32 %v654, 2147483648
        %v703 = vxor.u32 %v655, 2147483648
        %v704 = vxor.u32 %v684, 2147483648
        %v705 = vxor.u32 %v685, 2147483648
        %v706 = vxor.u32 %v686, 2147483648
        %v707 = vxor.u32 %v687, 2147483648
        %v708 = vxor.u32 %v656, 2147483648
        %v709 = vxor.u32 %v657, 2147483648
        %v710 = vxor.u32 %v658, 2147483648
        %v711 = vxor.u32 %v659, 2147483648
        %v712 = vxor.u32 %v688, 2147483648
        %v713 = vxor.u32 %v689, 2147483648
        %v714 = vxor.u32 %v690, 2147483648
        %v715 = vxor.u32 %v691, 2147483648
        %v716 = vxor.u32 %v660, 2147483648
        %v717 = vxor.u32 %v661, 2147483648
        %v718 = vxor.u32 %v662, 2147483648
        %v719 = vxor.u32 %v663, 2147483648
        %v720 = vxor.u32 %v692, 2147483648
        %v721 = vxor.u32 %v693, 2147483648
        %v722 = vxor.u32 %v694, 2147483648
        %v723 = vxor.u32 %v695, 2147483648
        %v724 = vxor.u32 %v664, 2147483648
        %v725 = vxor.u32 %v665, 2147483648
        %v726 = vxor.u32 %v666, 2147483648
        %v727 = vxor.u32 %v667, 2147483648
        %v728 = vxor.u32 %v696, 2147483648
        %v729 = vxor.u32 %v697, 2147483648
        %v730 = vxor.u32 %v698, 2147483648
        %v731 = vxor.u32 %v699, 2147483648
        %v732 = vmul.f32 %v700, 1.442695
        %v733 = vpow.pop %v732
        %v734 = vmul.f32 %v701, 1.442695
        %v735 = vpow.pop %v734
        %v736 = vmul.f32 %v702, 1.442695
        %v737 = vpow.pop %v736
        %v738 = vmul.f32 %v703, 1.442695
        %v739 = vpow.pop %v738
        %v740 = vmul.f32 %v704, 1.442695
        %v741 = vpow.pop %v740
        %v742 = vmul.f32 %v705, 1.442695
        %v743 = vpow.pop %v742
        %v744 = vmul.f32 %v706, 1.442695
        %v745 = vpow.pop %v744
        %v746 = vmul.f32 %v707, 1.442695
        %v747 = vpow.pop %v746
        %v748 = vmul.f32 %v708, 1.442695
        %v749 = vpow.pop %v748
        %v750 = vmul.f32 %v709, 1.442695
        %v751 = vpow.pop %v750
        %v752 = vmul.f32 %v710, 1.442695
        %v753 = vpow.pop %v752
        %v754 = vmul.f32 %v711, 1.442695
        %v755 = vpow.pop %v754
        %v756 = vmul.f32 %v712, 1.442695
        %v757 = vpow.pop %v756
        %v758 = vmul.f32 %v713, 1.442695
        %v759 = vpow.pop %v758
        %v760 = vmul.f32 %v714, 1.442695
        %v761 = vpow.pop %v760
        %v762 = vmul.f32 %v715, 1.442695
        %v763 = vpow.pop %v762
        %v764 = vmul.f32 %v716, 1.442695
        %v765 = vpow.pop %v764
        %v766 = vmul.f32 %v717, 1.442695
        %v767 = vpow.pop %v766
        %v768 = vmul.f32 %v718, 1.442695
        %v769 = vpow.pop %v768
        %v770 = vmul.f32 %v719, 1.442695
        %v771 = vpow.pop %v770
        %v772 = vmul.f32 %v720, 1.442695
        %v773 = vpow.pop %v772
        %v774 = vmul.f32 %v721, 1.442695
        %v775 = vpow.pop %v774
        %v776 = vmul.f32 %v722, 1.442695
        %v777 = vpow.pop %v776
        %v778 = vmul.f32 %v723, 1.442695
        %v779 = vpow.pop %v778
        %v780 = vmul.f32 %v724, 1.442695
        %v781 = vpow.pop %v780
        %v782 = vmul.f32 %v725, 1.442695
        %v783 = vpow.pop %v782
        %v784 = vmul.f32 %v726, 1.442695
        %v785 = vpow.pop %v784
        %v786 = vmul.f32 %v727, 1.442695
        %v787 = vpow.pop %v786
        %v788 = vmul.f32 %v728, 1.442695
        %v789 = vpow.pop %v788
        %v790 = vmul.f32 %v729, 1.442695
        %v791 = vpow.pop %v790
        %v792 = vmul.f32 %v730, 1.442695
        %v793 = vpow.pop %v792
        %v794 = vmul.f32 %v731, 1.442695
        %v795 = vpow.pop %v794
        %v796 = vadd.f32 %v733, 1.0
        %v797 = vadd.f32 %v735, 1.0
        %v798 = vadd.f32 %v737, 1.0
        %v799 = vadd.f32 %v739, 1.0
        %v800 = vadd.f32 %v741, 1.0
        %v801 = vadd.f32 %v743, 1.0
        %v802 = vadd.f32 %v745, 1.0
        %v803 = vadd.f32 %v747, 1.0
        %v804 = vadd.f32 %v749, 1.0
        %v805 = vadd.f32 %v751, 1.0
        %v806 = vadd.f32 %v753, 1.0
        %v807 = vadd.f32 %v755, 1.0
        %v808 = vadd.f32 %v757, 1.0
        %v809 = vadd.f32 %v759, 1.0
        %v810 = vadd.f32 %v761, 1.0
        %v811 = vadd.f32 %v763, 1.0
        %v812 = vadd.f32 %v765, 1.0
        %v813 = vadd.f32 %v767, 1.0
        %v814 = vadd.f32 %v769, 1.0
        %v815 = vadd.f32 %v771, 1.0
        %v816 = vadd.f32 %v773, 1.0
        %v817 = vadd.f32 %v775, 1.0
        %v818 = vadd.f32 %v777, 1.0
        %v819 = vadd.f32 %v779, 1.0
        %v820 = vadd.f32 %v781, 1.0
        %v821 = vadd.f32 %v783, 1.0
        %v822 = vadd.f32 %v785, 1.0
        %v823 = vadd.f32 %v787, 1.0
        %v824 = vadd.f32 %v789, 1.0
        %v825 = vadd.f32 %v791, 1.0
        %v826 = vadd.f32 %v793, 1.0
        %v827 = vadd.f32 %v795, 1.0
        %v828 = vrcp.pop %v796
        %v829 = vmul.f32 1.0, %v828
        %v830 = vrcp.pop %v797
        %v831 = vmul.f32 1.0, %v830
        %v832 = vrcp.pop %v798
        %v833 = vmul.f32 1.0, %v832
        %v834 = vrcp.pop %v799
        %v835 = vmul.f32 1.0, %v834
        %v836 = vrcp.pop %v800
        %v837 = vmul.f32 1.0, %v836
        %v838 = vrcp.pop %v801
        %v839 = vmul.f32 1.0, %v838
        %v840 = vrcp.pop %v802
        %v841 = vmul.f32 1.0, %v840
        %v842 = vrcp.pop %v803
        %v843 = vmul.f32 1.0, %v842
        %v844 = vrcp.pop %v804
        %v845 = vmul.f32 1.0, %v844
        %v846 = vrcp.pop %v805
        %v847 = vmul.f32 1.0, %v846
        %v848 = vrcp.pop %v806
        %v849 = vmul.f32 1.0, %v848
        %v850 = vrcp.pop %v807
        %v851 = vmul.f32 1.0, %v850
        %v852 = vrcp.pop %v808
        %v853 = vmul.f32 1.0, %v852
        %v854 = vrcp.pop %v809
        %v855 = vmul.f32 1.0, %v854
        %v856 = vrcp.pop %v810
        %v857 = vmul.f32 1.0, %v856
        %v858 = vrcp.pop %v811
        %v859 = vmul.f32 1.0, %v858
        %v860 = vrcp.pop %v812
        %v861 = vmul.f32 1.0, %v860
        %v862 = vrcp.pop %v813
        %v863 = vmul.f32 1.0, %v862
        %v864 = vrcp.pop %v814
        %v865 = vmul.f32 1.0, %v864
        %v866 = vrcp.pop %v815
        %v867 = vmul.f32 1.0, %v866
        %v868 = vrcp.pop %v816
        %v869 = vmul.f32 1.0, %v868
        %v870 = vrcp.pop %v817
        %v871 = vmul.f32 1.0, %v870
        %v872 = vrcp.pop %v818
        %v873 = vmul.f32 1.0, %v872
        %v874 = vrcp.pop %v819
        %v875 = vmul.f32 1.0, %v874
        %v876 = vrcp.pop %v820
        %v877 = vmul.f32 1.0, %v876
        %v878 = vrcp.pop %v821
        %v879 = vmul.f32 1.0, %v878
        %v880 = vrcp.pop %v822
        %v881 = vmul.f32 1.0, %v880
        %v882 = vrcp.pop %v823
        %v883 = vmul.f32 1.0, %v882
        %v884 = vrcp.pop %v824
        %v885 = vmul.f32 1.0, %v884
        %v886 = vrcp.pop %v825
        %v887 = vmul.f32 1.0, %v886
        %v888 = vrcp.pop %v826
        %v889 = vmul.f32 1.0, %v888
        %v890 = vrcp.pop %v827
        %v891 = vmul.f32 1.0, %v890
        %v892 = vmul.f32 %v652, %v829
        %v893 = vmul.f32 %v653, %v831
        %v894 = vmul.f32 %v654, %v833
        %v895 = vmul.f32 %v655, %v835
        %v896 = vmul.f32 %v684, %v837
        %v897 = vmul.f32 %v685, %v839
        %v898 = vmul.f32 %v686, %v841
        %v899 = vmul.f32 %v687, %v843
        %v900 = vmul.f32 %v656, %v845
        %v901 = vmul.f32 %v657, %v847
        %v902 = vmul.f32 %v658, %v849
        %v903 = vmul.f32 %v659, %v851
        %v904 = vmul.f32 %v688, %v853
        %v905 = vmul.f32 %v689, %v855
        %v906 = vmul.f32 %v690, %v857
        %v907 = vmul.f32 %v691, %v859
        %v908 = vmul.f32 %v660, %v861
        %v909 = vmul.f32 %v661, %v863
        %v910 = vmul.f32 %v662, %v865
        %v911 = vmul.f32 %v663, %v867
        %v912 = vmul.f32 %v692, %v869
        %v913 = vmul.f32 %v693, %v871
        %v914 = vmul.f32 %v694, %v873
        %v915 = vmul.f32 %v695, %v875
        %v916 = vmul.f32 %v664, %v877
        %v917 = vmul.f32 %v665, %v879
        %v918 = vmul.f32 %v666, %v881
        %v919 = vmul.f32 %v667, %v883
        %v920 = vmul.f32 %v696, %v885
        %v921 = vmul.f32 %v697, %v887
        %v922 = vmul.f32 %v698, %v889
        %v923 = vmul.f32 %v699, %v891
        %v924 = vld [vmem:[%s7] sm:$0x7]
        %v925 = vld [vmem:[%s8] sm:$0x7]
        %927 = vset.pattern.permute.xlu0 0
        %928 = vperm.xlu0 %927, %v925
        %v929 = vpop.permute.xlu0 %928
        %vm931 = vcmask 261120
        %v933 = vsel %vm931, %v924, 0
        %935 = vmatprep.subr.mxu0 %v893
        %936 = vmatpush1.msra.mxu0 %v892
        %937 = vmatprep.subr.mxu0 %v901
        %938 = vmatpush1.msra.mxu0 %v900
        %939 = vmatprep.subr.mxu0 %v909
        %940 = vmatpush1.msra.mxu0 %v908
        %941 = vmatprep.subr.mxu0 %v917
        %942 = vmatpush1.msra.mxu0 %v916
        %943 = vmatprep.subr.mxu0 0.0
        %944 = vmatpush1.msra.mxu0 0.0
        %945 = vmatprep.subr.mxu0 0.0
        %946 = vmatpush1.msra.mxu0 0.0
        %947 = vmatprep.subr.mxu0 0.0
        %948 = vmatpush1.msra.mxu0 0.0
        %949 = vmatprep.subr.mxu0 0.0
        %950 = vmatpush1.msra.mxu0 0.0
        %951 = vmatprep.subr.mxu0 0.0
        %952 = vmatpush1.msra.mxu0 0.0
        %953 = vmatprep.subr.mxu0 0.0
        %954 = vmatpush1.msra.mxu0 0.0
        %955 = vmatprep.subr.mxu0 0.0
        %956 = vmatpush1.msra.mxu0 0.0
        %957 = vmatprep.subr.mxu0 0.0
        %958 = vmatpush1.msra.mxu0 0.0
        %959 = vmatprep.subr.mxu0 0.0
        %960 = vmatpush1.msra.mxu0 0.0
        %961 = vmatprep.subr.mxu0 0.0
        %962 = vmatpush1.msra.mxu0 0.0
        %963 = vmatprep.subr.mxu0 0.0
        %964 = vmatpush1.msra.mxu0 0.0
        %965 = vmatprep.subr.mxu0 0.0
        %966 = vmatpush1.msra.mxu0 0.0
        %967 = vmatprep.subr.mxu0 0.0
        %968 = vmatpush1.msra.mxu0 0.0
        %969 = vmatprep.subr.mxu0 0.0
        %970 = vmatpush1.msra.mxu0 0.0
        %971 = vmatprep.subr.mxu0 0.0
        %972 = vmatpush1.msra.mxu0 0.0
        %973 = vmatprep.subr.mxu0 0.0
        %974 = vmatpush1.msra.mxu0 0.0
        %975 = vmatprep.subr.mxu0 0.0
        %976 = vmatpush1.msra.mxu0 0.0
        %977 = vmatprep.subr.mxu0 0.0
        %978 = vmatpush1.msra.mxu0 0.0
        %979 = vmatprep.subr.mxu0 0.0
        %980 = vmatpush1.msra.mxu0 0.0
        %981 = vmatprep.subr.mxu0 0.0
        %982 = vmatpush1.msra.mxu0 0.0
        %983 = vmatprep.subr.mxu0 0.0
        %984 = vmatpush1.msra.mxu0 0.0
        %985 = vmatprep.subr.mxu0 0.0
        %986 = vmatpush1.msra.mxu0 0.0
        %987 = vmatprep.subr.mxu0 0.0
        %988 = vmatpush1.msra.mxu0 0.0
        %989 = vmatprep.subr.mxu0 0.0
        %990 = vmatpush1.msra.mxu0 0.0
        %991 = vmatprep.subr.mxu0 0.0
        %992 = vmatpush1.msra.mxu0 0.0
        %993 = vmatprep.subr.mxu0 0.0
        %994 = vmatpush1.msra.mxu0 0.0
        %995 = vmatprep.subr.mxu0 0.0
        %996 = vmatpush1.msra.mxu0 0.0
        %997 = vmatprep.subr.mxu0 0.0
        %998 = vmatpush1.msra.mxu0 0.0
        %999 = vmatprep.mubr.f32.mxu0 0.0
        %1000 = vmatmul.mubr.f32.gmra.mrb[0].mxu0 %v933
        %v1001 = vpop.f32.mrb[0].mxu0
        %v1002 = vadd.f32 %v929, %v1001
        %v1003 = vpop.f32.mrb[0].mxu0
        %v1004 = vadd.f32 %v929, %v1003
        %1005 = vdwg.mxu0
        %1006 = vmatprep.subr.mxu0 %v895
        %1007 = vmatpush1.msra.mxu0 %v894
        %1008 = vmatprep.subr.mxu0 %v903
        %1009 = vmatpush1.msra.mxu0 %v902
        %1010 = vmatprep.subr.mxu0 %v911
        %1011 = vmatpush1.msra.mxu0 %v910
        %1012 = vmatprep.subr.mxu0 %v919
        %1013 = vmatpush1.msra.mxu0 %v918
        %1014 = vmatprep.subr.mxu0 0.0
        %1015 = vmatpush1.msra.mxu0 0.0
        %1016 = vmatprep.subr.mxu0 0.0
        %1017 = vmatpush1.msra.mxu0 0.0
        %1018 = vmatprep.subr.mxu0 0.0
        %1019 = vmatpush1.msra.mxu0 0.0
        %1020 = vmatprep.subr.mxu0 0.0
        %1021 = vmatpush1.msra.mxu0 0.0
        %1022 = vmatprep.subr.mxu0 0.0
        %1023 = vmatpush1.msra.mxu0 0.0
        %1024 = vmatprep.subr.mxu0 0.0
        %1025 = vmatpush1.msra.mxu0 0.0
        %1026 = vmatprep.subr.mxu0 0.0
        %1027 = vmatpush1.msra.mxu0 0.0
        %1028 = vmatprep.subr.mxu0 0.0
        %1029 = vmatpush1.msra.mxu0 0.0
        %1030 = vmatprep.subr.mxu0 0.0
        %1031 = vmatpush1.msra.mxu0 0.0
        %1032 = vmatprep.subr.mxu0 0.0
        %1033 = vmatpush1.msra.mxu0 0.0
        %1034 = vmatprep.subr.mxu0 0.0
        %1035 = vmatpush1.msra.mxu0 0.0
        %1036 = vmatprep.subr.mxu0 0.0
        %1037 = vmatpush1.msra.mxu0 0.0
        %1038 = vmatprep.subr.mxu0 0.0
        %1039 = vmatpush1.msra.mxu0 0.0
        %1040 = vmatprep.subr.mxu0 0.0
        %1041 = vmatpush1.msra.mxu0 0.0
        %1042 = vmatprep.subr.mxu0 0.0
        %1043 = vmatpush1.msra.mxu0 0.0
        %1044 = vmatprep.subr.mxu0 0.0
        %1045 = vmatpush1.msra.mxu0 0.0
        %1046 = vmatprep.subr.mxu0 0.0
        %1047 = vmatpush1.msra.mxu0 0.0
        %1048 = vmatprep.subr.mxu0 0.0
        %1049 = vmatpush1.msra.mxu0 0.0
        %1050 = vmatprep.subr.mxu0 0.0
        %1051 = vmatpush1.msra.mxu0 0.0
        %1052 = vmatprep.subr.mxu0 0.0
        %1053 = vmatpush1.msra.mxu0 0.0
        %1054 = vmatprep.subr.mxu0 0.0
        %1055 = vmatpush1.msra.mxu0 0.0
        %1056 = vmatprep.subr.mxu0 0.0
        %1057 = vmatpush1.msra.mxu0 0.0
        %1058 = vmatprep.subr.mxu0 0.0
        %1059 = vmatpush1.msra.mxu0 0.0
        %1060 = vmatprep.subr.mxu0 0.0
        %1061 = vmatpush1.msra.mxu0 0.0
        %1062 = vmatprep.subr.mxu0 0.0
        %1063 = vmatpush1.msra.mxu0 0.0
        %1064 = vmatprep.subr.mxu0 0.0
        %1065 = vmatpush1.msra.mxu0 0.0
        %1066 = vmatprep.subr.mxu0 0.0
        %1067 = vmatpush1.msra.mxu0 0.0
        %1068 = vmatprep.subr.mxu0 0.0
        %1069 = vmatpush1.msra.mxu0 0.0
        %1070 = vmatprep.mubr.f32.mxu0 0.0
        %1071 = vmatmul.mubr.f32.gmra.mrb[0].mxu0 %v933
        %v1072 = vpop.f32.mrb[0].mxu0
        %v1073 = vadd.f32 %v929, %v1072
        %v1074 = vpop.f32.mrb[0].mxu0
        %v1075 = vadd.f32 %v929, %v1074
        %1076 = vdwg.mxu0
        %1077 = vmatprep.subr.mxu0 %v897
        %1078 = vmatpush1.msra.mxu0 %v896
        %1079 = vmatprep.subr.mxu0 %v905
        %1080 = vmatpush1.msra.mxu0 %v904
        %1081 = vmatprep.subr.mxu0 %v913
        %1082 = vmatpush1.msra.mxu0 %v912
        %1083 = vmatprep.subr.mxu0 %v921
        %1084 = vmatpush1.msra.mxu0 %v920
        %1085 = vmatprep.subr.mxu0 0.0
        %1086 = vmatpush1.msra.mxu0 0.0
        %1087 = vmatprep.subr.mxu0 0.0
        %1088 = vmatpush1.msra.mxu0 0.0
        %1089 = vmatprep.subr.mxu0 0.0
        %1090 = vmatpush1.msra.mxu0 0.0
        %1091 = vmatprep.subr.mxu0 0.0
        %1092 = vmatpush1.msra.mxu0 0.0
        %1093 = vmatprep.subr.mxu0 0.0
        %1094 = vmatpush1.msra.mxu0 0.0
        %1095 = vmatprep.subr.mxu0 0.0
        %1096 = vmatpush1.msra.mxu0 0.0
        %1097 = vmatprep.subr.mxu0 0.0
        %1098 = vmatpush1.msra.mxu0 0.0
        %1099 = vmatprep.subr.mxu0 0.0
        %1100 = vmatpush1.msra.mxu0 0.0
        %1101 = vmatprep.subr.mxu0 0.0
        %1102 = vmatpush1.msra.mxu0 0.0
        %1103 = vmatprep.subr.mxu0 0.0
        %1104 = vmatpush1.msra.mxu0 0.0
        %1105 = vmatprep.subr.mxu0 0.0
        %1106 = vmatpush1.msra.mxu0 0.0
        %1107 = vmatprep.subr.mxu0 0.0
        %1108 = vmatpush1.msra.mxu0 0.0
        %1109 = vmatprep.subr.mxu0 0.0
        %1110 = vmatpush1.msra.mxu0 0.0
        %1111 = vmatprep.subr.mxu0 0.0
        %1112 = vmatpush1.msra.mxu0 0.0
        %1113 = vmatprep.subr.mxu0 0.0
        %1114 = vmatpush1.msra.mxu0 0.0
        %1115 = vmatprep.subr.mxu0 0.0
        %1116 = vmatpush1.msra.mxu0 0.0
        %1117 = vmatprep.subr.mxu0 0.0
        %1118 = vmatpush1.msra.mxu0 0.0
        %1119 = vmatprep.subr.mxu0 0.0
        %1120 = vmatpush1.msra.mxu0 0.0
        %1121 = vmatprep.subr.mxu0 0.0
        %1122 = vmatpush1.msra.mxu0 0.0
        %1123 = vmatprep.subr.mxu0 0.0
        %1124 = vmatpush1.msra.mxu0 0.0
        %1125 = vmatprep.subr.mxu0 0.0
        %1126 = vmatpush1.msra.mxu0 0.0
        %1127 = vmatprep.subr.mxu0 0.0
        %1128 = vmatpush1.msra.mxu0 0.0
        %1129 = vmatprep.subr.mxu0 0.0
        %1130 = vmatpush1.msra.mxu0 0.0
        %1131 = vmatprep.subr.mxu0 0.0
        %1132 = vmatpush1.msra.mxu0 0.0
        %1133 = vmatprep.subr.mxu0 0.0
        %1134 = vmatpush1.msra.mxu0 0.0
        %1135 = vmatprep.subr.mxu0 0.0
        %1136 = vmatpush1.msra.mxu0 0.0
        %1137 = vmatprep.subr.mxu0 0.0
        %1138 = vmatpush1.msra.mxu0 0.0
        %1139 = vmatprep.subr.mxu0 0.0
        %1140 = vmatpush1.msra.mxu0 0.0
        %1141 = vmatprep.mubr.f32.mxu0 0.0
        %1142 = vmatmul.mubr.f32.gmra.mrb[0].mxu0 %v933
        %v1143 = vpop.f32.mrb[0].mxu0
        %v1144 = vadd.f32 %v929, %v1143
        %v1145 = vpop.f32.mrb[0].mxu0
        %v1146 = vadd.f32 %v929, %v1145
        %1147 = vdwg.mxu0
        %1148 = vmatprep.subr.mxu0 %v899
        %1149 = vmatpush1.msra.mxu0 %v898
        %1150 = vmatprep.subr.mxu0 %v907
        %1151 = vmatpush1.msra.mxu0 %v906
        %1152 = vmatprep.subr.mxu0 %v915
        %1153 = vmatpush1.msra.mxu0 %v914
        %1154 = vmatprep.subr.mxu0 %v923
        %1155 = vmatpush1.msra.mxu0 %v922
        %1156 = vmatprep.subr.mxu0 0.0
        %1157 = vmatpush1.msra.mxu0 0.0
        %1158 = vmatprep.subr.mxu0 0.0
        %1159 = vmatpush1.msra.mxu0 0.0
        %1160 = vmatprep.subr.mxu0 0.0
        %1161 = vmatpush1.msra.mxu0 0.0
        %1162 = vmatprep.subr.mxu0 0.0
        %1163 = vmatpush1.msra.mxu0 0.0
        %1164 = vmatprep.subr.mxu0 0.0
        %1165 = vmatpush1.msra.mxu0 0.0
        %1166 = vmatprep.subr.mxu0 0.0
        %1167 = vmatpush1.msra.mxu0 0.0
        %1168 = vmatprep.subr.mxu0 0.0
        %1169 = vmatpush1.msra.mxu0 0.0
        %1170 = vmatprep.subr.mxu0 0.0
        %1171 = vmatpush1.msra.mxu0 0.0
        %1172 = vmatprep.subr.mxu0 0.0
        %1173 = vmatpush1.msra.mxu0 0.0
        %1174 = vmatprep.subr.mxu0 0.0
        %1175 = vmatpush1.msra.mxu0 0.0
        %1176 = vmatprep.subr.mxu0 0.0
        %1177 = vmatpush1.msra.mxu0 0.0
        %1178 = vmatprep.subr.mxu0 0.0
        %1179 = vmatpush1.msra.mxu0 0.0
        %1180 = vmatprep.subr.mxu0 0.0
        %1181 = vmatpush1.msra.mxu0 0.0
        %1182 = vmatprep.subr.mxu0 0.0
        %1183 = vmatpush1.msra.mxu0 0.0
        %1184 = vmatprep.subr.mxu0 0.0
        %1185 = vmatpush1.msra.mxu0 0.0
        %1186 = vmatprep.subr.mxu0 0.0
        %1187 = vmatpush1.msra.mxu0 0.0
        %1188 = vmatprep.subr.mxu0 0.0
        %1189 = vmatpush1.msra.mxu0 0.0
        %1190 = vmatprep.subr.mxu0 0.0
        %1191 = vmatpush1.msra.mxu0 0.0
        %1192 = vmatprep.subr.mxu0 0.0
        %1193 = vmatpush1.msra.mxu0 0.0
        %1194 = vmatprep.subr.mxu0 0.0
        %1195 = vmatpush1.msra.mxu0 0.0
        %1196 = vmatprep.subr.mxu0 0.0
        %1197 = vmatpush1.msra.mxu0 0.0
        %1198 = vmatprep.subr.mxu0 0.0
        %1199 = vmatpush1.msra.mxu0 0.0
        %1200 = vmatprep.subr.mxu0 0.0
        %1201 = vmatpush1.msra.mxu0 0.0
        %1202 = vmatprep.subr.mxu0 0.0
        %1203 = vmatpush1.msra.mxu0 0.0
        %1204 = vmatprep.subr.mxu0 0.0
        %1205 = vmatpush1.msra.mxu0 0.0
        %1206 = vmatprep.subr.mxu0 0.0
        %1207 = vmatpush1.msra.mxu0 0.0
        %1208 = vmatprep.subr.mxu0 0.0
        %1209 = vmatpush1.msra.mxu0 0.0
        %1210 = vmatprep.subr.mxu0 0.0
        %1211 = vmatpush1.msra.mxu0 0.0
        %1212 = vmatprep.mubr.f32.mxu0 0.0
        %1213 = vmatmul.mubr.f32.gmra.mrb[0].mxu0 %v933
        %v1214 = vpop.f32.mrb[0].mxu0
        %v1215 = vadd.f32 %v929, %v1214
        %v1216 = vpop.f32.mrb[0].mxu0
        %v1217 = vadd.f32 %v929, %v1216
        %1218 = vdwg.mxu0
        %v1219 = vld [vmem:[%s5] sm:$0xf]
        %v1220 = vsub.f32 %v1002, %v1144
        %v1221 = vsub.f32 %v1004, %v1146
        %v1222 = vsub.f32 %v1073, %v1215
        %v1223 = vsub.f32 %v1075, %v1217
        %v1225 = vlaneseq
        %v1226 = vshrl.u32 %v1225, 7
        %v1227 = vsub.s32 0, %v1226
        %v1228 = vrot.slane %v1219, %v1227
        %v1229 = vlaneseq
        %v1230 = vshrl.u32 %v1229, 7
        %v1231 = vsub.s32 1, %v1230
        %v1232 = vrot.slane %v1219, %v1231
        %v1233 = vlaneseq
        %v1234 = vshrl.u32 %v1233, 7
        %v1235 = vsub.s32 2, %v1234
        %v1236 = vrot.slane %v1219, %v1235
        %v1237 = vlaneseq
        %v1238 = vshrl.u32 %v1237, 7
        %v1239 = vsub.s32 3, %v1238
        %v1240 = vrot.slane %v1219, %v1239
        %v1245 = vmul.f32 %v1228, %v1220
        %v1246 = vmul.f32 %v1232, %v1221
        %v1247 = vmul.f32 %v1236, %v1222
        %v1248 = vmul.f32 %v1240, %v1223
        %v1249 = vadd.f32 %v1144, %v1245
        %v1250 = vadd.f32 %v1146, %v1246
        %v1251 = vadd.f32 %v1215, %v1247
        %v1252 = vadd.f32 %v1217, %v1248
        %v1253 = vstv %s336
        %v1254 = vmul.f32 %v1253, %v346
        %v1255 = vmul.f32 %v1253, %v347
        %v1256 = vstv %s338
        %v1257 = vmul.f32 %v1256, %v1249
        %v1258 = vmul.f32 %v1256, %v1250
        %v1259 = vmul.f32 %v1256, %v1251
        %v1260 = vmul.f32 %v1256, %v1252
        %v1265 = vcombine.low %v1257, %v1258
        %v1266 = vcombine.low %v1259, %v1260
        %v1269 = vsub.f32 %v1254, %v1265
        %v1270 = vsub.f32 %v1255, %v1266
        %v1271 = vmax.f32 %v1269, -1.0
        %v1272 = vmax.f32 %v1270, -1.0
        %v1273 = vmin.f32 %v1271, 1.0
        %v1274 = vmin.f32 %v1272, 1.0
        %v1275 = vsub.f32 %v1254, %v1273
        %v1276 = vsub.f32 %v1255, %v1274
        %v1277 = vstv %s345
        %v1278 = vmul.f32 %v1275, %v1277
        %v1279 = vmul.f32 %v1276, %v1277
        %v1280 = vstv %s340
        %v1281 = vmul.f32 %v1280, %v1273
        %v1282 = vmul.f32 %v1280, %v1274
        %v1283 = vstv %s342
        %v1284 = vmul.f32 %v1283, %v1278
        %v1285 = vmul.f32 %v1283, %v1279
        %v1286 = vadd.f32 %v1281, %v1284
        %v1287 = vadd.f32 %v1282, %v1285
        %1288 = vst [vmem:[#allocation2] sm:$0x77] %v1286
        %1289 = vst [vmem:[#allocation2 + $0x8] sm:$0x77] %v1287
        %1290 = vst [vmem:[%s326] sm:$0x77] %v1286
        %1291 = vst [vmem:[%s326 + $0x8] sm:$0x77] %v1287
        %p1292 = scmp.lt.s32.totalorder %s21, 7
        %s1293 = scalar_select %p1292, %s21, 7
        %s1294 = smul.addr %s1293, 4
        %s1295 = smul.addr %s1294, 4
        %s1296 = scalar_lea.vmem %s9, %s1295
        // Predicated region
        $region65: #{_sample_loop.1} parent=55 // pred_check
          %p1297 = pneg %p228
        $region66: #{_sample_loop.1} parent=55 // pred_check_branch
          %1299 = sbr.rel (%p1297) target = $region68
        $region67: #{_sample_loop.1} parent=55 // pred_region
          _
        $region68: #{_sample_loop.1} parent=55 // pred_fallthru
          _
      $region56: #{_sample_loop.1} parent=5 // pred_fallthru
        _
      %p1300 = scmp.le.s32.totalorder 2, %s16
      // Predicated region
      $region69: #{_sample_loop.1} parent=5 // pred_check
        %p1301 = pneg %p1300
      $region70: #{_sample_loop.1} parent=5 // pred_check_branch
        %1303 = sbr.rel (%p1301) target = $region72
      $region71: #{_sample_loop.1} parent=5 // pred_region
        %s1304 = ssub.s32 %s16, 2
        // Predicated region
        $region73: #{_sample_loop.1} parent=71 // pred_check
          %p1305 = pneg %p234
        $region74: #{_sample_loop.1} parent=71 // pred_check_branch
          %1307 = sbr.rel (%p1305) target = $region76
        $region75: #{_sample_loop.1} parent=71 // pred_region
          %p1308 = scmp.lt.s32.totalorder %s22, 7
          %s1309 = scalar_select %p1308, %s22, 7
          %s1310 = smul.addr %s1309, 4
          %s1311 = smul.addr %s1310, 4
          %s1312 = scalar_lea.vmem %s9, %s1311
        $region76: #{_sample_loop.1} parent=71 // pred_fallthru
          _
      $region72: #{_sample_loop.1} parent=5 // pred_fallthru
        _
    $region6: #{_sample_loop.1} parent=1 // loop_footer
      %s20 = sadd.s32 1, %s16
    $region7: #{_sample_loop.1} parent=1 // loop_footer_branch
      %15 = sbr.rel target = $region3
    $region8: #{_sample_loop.1} parent=1 // loop_exit
      _
    %1313 = vsyncpa [#allocation4], 1
    %s1314 = scalar_lea.sflag [#allocation4], 1
    %1315 = vsyncpa %s1314, 1

</llo_original>
